<compile_context>
chip_gen: v6e
topology: v6e:2x2x1
jax: 0.10.0
libtpu: 0.0.40
codegen_flags: <defaults>
</compile_context>

<pallas_src>
import functools

import jax
import jax.numpy as jnp
from jax.experimental import pallas as pl
from jax.experimental.pallas import tpu as pltpu


def _round_up(x, m):
    return ((x + m - 1) // m) * m


def _cdiv(a, b):
    return (a + b - 1) // b


def _layer_dims(state_dim, action_dim):
    # Hidden stack + fused (mu | log_sigma) head.
    return ((state_dim, 128), (128, 128), (128, 64), (64, 32),
            (32, 2 * action_dim))


# --------------------------------------------------------------------------
# Kernel
# --------------------------------------------------------------------------
def _mlp_kernel(x_ref, w_ref, b_ref, out_ref, *, dims):
    """One batch tile through the whole MLP.

    x_ref:   (tile, state_dim)              f32
    w_ref:   (n_layers, slab_in, slab_out)  f32, layer l weight at [l,:din,:dout]
    b_ref:   (n_layers, slab_out)           f32, layer l bias   at [l,:dout]
    out_ref: (tile, 2*action_dim)           f32
    """
    h = x_ref[...]
    n_layers = len(dims)
    for l, (din, dout) in enumerate(dims):
        w = w_ref[l, :din, :dout]          # static, tile-aligned corner slice
        b = b_ref[l:l + 1, :dout]          # (1, dout) -> broadcasts over rows
        h = jnp.dot(h, w, preferred_element_type=jnp.float32) + b
        if l < n_layers - 1:               # ReLU on hidden layers only
            h = jnp.maximum(h, 0.0)
    out_ref[...] = h                        # narrow (tile, 2A) store


# --------------------------------------------------------------------------
# Wrapper
# --------------------------------------------------------------------------
def _choose_tile(B, batch_tile):
    """Batch tile: multiple of 8, minimal padding, >=2 grid steps for big B."""
    B8 = _round_up(max(B, 1), 8)
    max_tile = max(8, _round_up(batch_tile, 8))
    n_steps = max(1, _cdiv(B8, max_tile))
    if B8 >= 512 and n_steps == 1:
        n_steps = 2                         # let v7x megacore split the batch
    tile = _round_up(_cdiv(B8, n_steps), 8)
    return tile, n_steps * tile


def _forward_from_slab_xla(state, packed, action_dim):
    """Plain-XLA forward from the packed slabs (tiny-batch fast path)."""
    dims = packed["dims"]
    h = state
    for l, (din, dout) in enumerate(dims):
        w = packed["w_slab"][l, :din, :dout]
        b = packed["b_slab"][l, :dout]
        h = h @ w + b
        if l < len(dims) - 1:
            h = jnp.maximum(h, 0.0)
    return h[:, :action_dim], h[:, action_dim:2 * action_dim]


def continuous_action_nn_forward(state, packed, action_dim, *,
                                 batch_tile=2048, min_pallas_batch=64):
    """Fused MLP forward. state: (B, state_dim) f32. Returns (mu, log_sigma)."""
    B, state_dim = state.shape
    dims = packed["dims"]
    head_dim = dims[-1][1]                  # 2 * action_dim

    # Tiny-batch fast path: Pallas fixed overhead cannot win there.
    if B < min_pallas_batch:
        return _forward_from_slab_xla(state, packed, action_dim)

    tile, B_pad = _choose_tile(B, batch_tile)
    if B_pad != B:
        state = jnp.pad(state, ((0, B_pad - B), (0, 0)))

    w_slab = packed["w_slab"]
    b_slab = packed["b_slab"]

    in_specs = [
        pl.BlockSpec((tile, state_dim), lambda i: (i, 0)),
        # Invariant operands: constant block index -> fetched once for the grid.
        pl.BlockSpec(w_slab.shape, lambda i: (0, 0, 0)),
        pl.BlockSpec(b_slab.shape, lambda i: (0, 0)),
    ]
    out_specs = pl.BlockSpec((tile, head_dim), lambda i: (i, 0))

    flops = 2 * B_pad * sum(din * dout for din, dout in dims)
    bytes_accessed = 4 * (B_pad * (state_dim + head_dim)
                          + w_slab.size + b_slab.size)
    cost = pl.CostEstimate(flops=flops, transcendentals=0,
                           bytes_accessed=bytes_accessed)

    out = pl.pallas_call(
        functools.partial(_mlp_kernel, dims=dims),
        out_shape=jax.ShapeDtypeStruct((B_pad, head_dim), jnp.float32),
        grid_spec=pltpu.PrefetchScalarGridSpec(
            num_scalar_prefetch=0,
            grid=(B_pad // tile,),
            in_specs=in_specs,
            out_specs=out_specs,
        ),
        compiler_params=pltpu.CompilerParams(
            dimension_semantics=("parallel",)),
        cost_estimate=cost,
    )(state, w_slab, b_slab)

    mu = out[:B, :action_dim]
    log_sigma = out[:B, action_dim:head_dim]
    return mu, log_sigma


# --------------------------------------------------------------------------
# Parameter handling
# --------------------------------------------------------------------------
def init_params(state_dim, action_dim, key):
    """f32 params matching PyTorch layer shapes (weights stored (in, out)).

    Init mimics PyTorch nn.Linear default U(-1/sqrt(in), 1/sqrt(in)).
    """
    dims = [(state_dim, 128), (128, 128), (128, 64), (64, 32),
            (32, action_dim), (32, action_dim)]
    names = ["1", "2", "3", "4", "mu", "ls"]
    params = {}
    keys = jax.random.split(key, 2 * len(dims))
    for idx, ((din, dout), name) in enumerate(zip(dims, names)):
        bound = 1.0 / jnp.sqrt(jnp.float32(din))
        params["w" + name] = jax.random.uniform(
            keys[2 * idx], (din, dout), jnp.float32, minval=-bound, maxval=bound)
        params["b" + name] = jax.random.uniform(
            keys[2 * idx + 1], (1, dout), jnp.float32, minval=-bound, maxval=bound)
    return params


def pack_params(params, state_dim, action_dim):
    """Pack all layers into one f32 weight slab + one f32 bias slab."""
    dims = _layer_dims(state_dim, action_dim)
    n_layers = len(dims)
    slab_in = _round_up(max(d for d, _ in dims), 8)
    slab_out = _round_up(max(d for _, d in dims), 128)

    # Fused (mu | log_sigma) head.
    wh = jnp.concatenate([params["wmu"], params["wls"]], axis=1)   # (32, 2A)
    bh = jnp.concatenate([params["bmu"], params["bls"]], axis=1)   # (1, 2A)

    ws = [params["w1"], params["w2"], params["w3"], params["w4"], wh]
    bs = [params["b1"], params["b2"], params["b3"], params["b4"], bh]

    w_slab = jnp.zeros((n_layers, slab_in, slab_out), jnp.float32)
    b_slab = jnp.zeros((n_layers, slab_out), jnp.float32)
    for l, ((din, dout), w, b) in enumerate(zip(dims, ws, bs)):
        w_slab = w_slab.at[l, :din, :dout].set(w.astype(jnp.float32))
        b_slab = b_slab.at[l, :dout].set(b.reshape(dout).astype(jnp.float32))

    return {"w_slab": w_slab, "b_slab": b_slab, "dims": dims}


def _reference_forward(state, params):
    """Pure-JAX f32 reference matching the PyTorch module semantics."""
    h = jnp.maximum(state @ params["w1"] + params["b1"], 0.0)
    h = jnp.maximum(h @ params["w2"] + params["b2"], 0.0)
    h = jnp.maximum(h @ params["w3"] + params["b3"], 0.0)
    h = jnp.maximum(h @ params["w4"] + params["b4"], 0.0)
    mu = h @ params["wmu"] + params["bmu"]
    ls = h @ params["wls"] + params["bls"]
    return mu, ls


# --------------------------------------------------------------------------
# Self-test
# --------------------------------------------------------------------------
if __name__ == "__main__":
    state_dim = 16
    action_dim = 4

    key = jax.random.PRNGKey(0)
    k_big, k_small, k_params = jax.random.split(key, 3)

    params = init_params(state_dim, action_dim, k_params)
    packed = pack_params(params, state_dim, action_dim)

    # --- Pallas path: batch large enough to exercise padding + 2 grid steps.
    B_big = 600
    state_big = jax.random.normal(k_big, (B_big, state_dim), jnp.float32)
    mu, log_sigma = continuous_action_nn_forward(state_big, packed, action_dim)
    mu = jax.block_until_ready(mu)
    log_sigma = jax.block_until_ready(log_sigma)
    mu_ref, ls_ref = _reference_forward(state_big, params)
    assert mu.shape == (B_big, action_dim)
    assert log_sigma.shape == (B_big, action_dim)
    assert jnp.allclose(mu, mu_ref, atol=2e-2, rtol=2e-2)
    assert jnp.allclose(log_sigma, ls_ref, atol=2e-2, rtol=2e-2)

    # --- Pallas path forced at a tiny batch (single 8-row tile).
    B_small = 8
    state_small = jax.random.normal(k_small, (B_small, state_dim), jnp.float32)
    mu_s, ls_s = continuous_action_nn_forward(state_small, packed, action_dim,
                                              min_pallas_batch=1)
    mu_s = jax.block_until_ready(mu_s)
    ls_s = jax.block_until_ready(ls_s)
    mu_sr, ls_sr = _reference_forward(state_small, params)
    assert mu_s.shape == (B_small, action_dim)
    assert jnp.allclose(mu_s, mu_sr, atol=2e-2, rtol=2e-2)
    assert jnp.allclose(ls_s, ls_sr, atol=2e-2, rtol=2e-2)

    # --- Tiny-batch XLA fallback path (default threshold).
    mu_f, ls_f = continuous_action_nn_forward(state_small, packed, action_dim)
    mu_f = jax.block_until_ready(mu_f)
    ls_f = jax.block_until_ready(ls_f)
    assert jnp.allclose(mu_f, mu_sr, atol=1e-4, rtol=1e-4)
    assert jnp.allclose(ls_f, ls_sr, atol=1e-4, rtol=1e-4)

    print("KERNEL_OK")
</pallas_src>

<mosaic_0001>
module attributes {stable_mosaic.version = 11 : i64} {
  func.func @_mlp_kernel(%arg0: i32, %arg1: memref<304x16xf32, #tpu.memory_space<vmem>>, %arg2: memref<5x128x128xf32, #tpu.memory_space<vmem>>, %arg3: memref<5x128xf32, #tpu.memory_space<vmem>>, %arg4: memref<304x8xf32, #tpu.memory_space<vmem>>) attributes {dimension_semantics = [#tpu.dimension_semantics<parallel>], iteration_bounds = array<i64: 2>, scalar_prefetch = 0 : i64, scratch_operands = 0 : i64, tpu.core_type = #tpu.core_type<tc>, window_params = [{transform_indices = @transform_0, window_bounds = array<i64: 304, 16>}, {pipeline_mode = #tpu.pipeline_mode<synchronous>, transform_indices = @transform_1, window_bounds = array<i64: 5, 128, 128>}, {pipeline_mode = #tpu.pipeline_mode<synchronous>, transform_indices = @transform_2, window_bounds = array<i64: 5, 128>}, {transform_indices = @transform_3, window_bounds = array<i64: 304, 8>}]} {
    %c0 = arith.constant 0 : index
    %c0_0 = arith.constant 0 : index
    %0 = vector.load %arg1[%c0, %c0_0] : memref<304x16xf32, #tpu.memory_space<vmem>>, vector<304x16xf32>
    %c0_1 = arith.constant 0 : index
    %c0_2 = arith.constant 0 : index
    %c0_3 = arith.constant 0 : index
    %1 = vector.load %arg2[%c0_1, %c0_2, %c0_3] : memref<5x128x128xf32, #tpu.memory_space<vmem>>, vector<1x16x128xf32>
    %2 = vector.shape_cast %1 : vector<1x16x128xf32> to vector<16x128xf32>
    %c0_4 = arith.constant 0 : index
    %c0_5 = arith.constant 0 : index
    %3 = vector.load %arg3[%c0_4, %c0_5] : memref<5x128xf32, #tpu.memory_space<vmem>>, vector<1x128xf32>
    %cst = arith.constant dense<0.000000e+00> : vector<304x128xf32>
    %4 = tpu.matmul %0, %2, %cst {dimension_numbers = #tpu.dot_dimension_numbers<[1], [0], [0], [1], [0, 0, 1, 1], [], []>} : vector<304x16xf32>, vector<16x128xf32>, vector<304x128xf32> -> vector<304x128xf32>
    %5 = vector.broadcast %3 : vector<1x128xf32> to vector<304x128xf32>
    %6 = arith.addf %4, %5 : vector<304x128xf32>
    %cst_6 = arith.constant 0.000000e+00 : f32
    %7 = vector.broadcast %cst_6 : f32 to vector<304x128xf32>
    %8 = arith.maximumf %6, %7 : vector<304x128xf32>
    %c1 = arith.constant 1 : index
    %c0_7 = arith.constant 0 : index
    %c0_8 = arith.constant 0 : index
    %9 = vector.load %arg2[%c1, %c0_7, %c0_8] : memref<5x128x128xf32, #tpu.memory_space<vmem>>, vector<1x128x128xf32>
    %10 = vector.shape_cast %9 : vector<1x128x128xf32> to vector<128x128xf32>
    %c1_9 = arith.constant 1 : index
    %c0_10 = arith.constant 0 : index
    %11 = vector.load %arg3[%c1_9, %c0_10] : memref<5x128xf32, #tpu.memory_space<vmem>>, vector<1x128xf32>
    %cst_11 = arith.constant dense<0.000000e+00> : vector<304x128xf32>
    %12 = tpu.matmul %8, %10, %cst_11 {dimension_numbers = #tpu.dot_dimension_numbers<[1], [0], [0], [1], [0, 0, 1, 1], [], []>} : vector<304x128xf32>, vector<128x128xf32>, vector<304x128xf32> -> vector<304x128xf32>
    %13 = vector.broadcast %11 : vector<1x128xf32> to vector<304x128xf32>
    %14 = arith.addf %12, %13 : vector<304x128xf32>
    %cst_12 = arith.constant 0.000000e+00 : f32
    %15 = vector.broadcast %cst_12 : f32 to vector<304x128xf32>
    %16 = arith.maximumf %14, %15 : vector<304x128xf32>
    %c2 = arith.constant 2 : index
    %c0_13 = arith.constant 0 : index
    %c0_14 = arith.constant 0 : index
    %17 = vector.load %arg2[%c2, %c0_13, %c0_14] : memref<5x128x128xf32, #tpu.memory_space<vmem>>, vector<1x128x64xf32>
    %18 = vector.shape_cast %17 : vector<1x128x64xf32> to vector<128x64xf32>
    %c2_15 = arith.constant 2 : index
    %c0_16 = arith.constant 0 : index
    %19 = vector.load %arg3[%c2_15, %c0_16] : memref<5x128xf32, #tpu.memory_space<vmem>>, vector<1x64xf32>
    %cst_17 = arith.constant dense<0.000000e+00> : vector<304x64xf32>
    %20 = tpu.matmul %16, %18, %cst_17 {dimension_numbers = #tpu.dot_dimension_numbers<[1], [0], [0], [1], [0, 0, 1, 1], [], []>} : vector<304x128xf32>, vector<128x64xf32>, vector<304x64xf32> -> vector<304x64xf32>
    %21 = vector.broadcast %19 : vector<1x64xf32> to vector<304x64xf32>
    %22 = arith.addf %20, %21 : vector<304x64xf32>
    %cst_18 = arith.constant 0.000000e+00 : f32
    %23 = vector.broadcast %cst_18 : f32 to vector<304x64xf32>
    %24 = arith.maximumf %22, %23 : vector<304x64xf32>
    %c3 = arith.constant 3 : index
    %c0_19 = arith.constant 0 : index
    %c0_20 = arith.constant 0 : index
    %25 = vector.load %arg2[%c3, %c0_19, %c0_20] : memref<5x128x128xf32, #tpu.memory_space<vmem>>, vector<1x64x32xf32>
    %26 = vector.shape_cast %25 : vector<1x64x32xf32> to vector<64x32xf32>
    %c3_21 = arith.constant 3 : index
    %c0_22 = arith.constant 0 : index
    %27 = vector.load %arg3[%c3_21, %c0_22] : memref<5x128xf32, #tpu.memory_space<vmem>>, vector<1x32xf32>
    %cst_23 = arith.constant dense<0.000000e+00> : vector<304x32xf32>
    %28 = tpu.matmul %24, %26, %cst_23 {dimension_numbers = #tpu.dot_dimension_numbers<[1], [0], [0], [1], [0, 0, 1, 1], [], []>} : vector<304x64xf32>, vector<64x32xf32>, vector<304x32xf32> -> vector<304x32xf32>
    %29 = vector.broadcast %27 : vector<1x32xf32> to vector<304x32xf32>
    %30 = arith.addf %28, %29 : vector<304x32xf32>
    %cst_24 = arith.constant 0.000000e+00 : f32
    %31 = vector.broadcast %cst_24 : f32 to vector<304x32xf32>
    %32 = arith.maximumf %30, %31 : vector<304x32xf32>
    %c4 = arith.constant 4 : index
    %c0_25 = arith.constant 0 : index
    %c0_26 = arith.constant 0 : index
    %33 = vector.load %arg2[%c4, %c0_25, %c0_26] : memref<5x128x128xf32, #tpu.memory_space<vmem>>, vector<1x32x8xf32>
    %34 = vector.shape_cast %33 : vector<1x32x8xf32> to vector<32x8xf32>
    %c4_27 = arith.constant 4 : index
    %c0_28 = arith.constant 0 : index
    %35 = vector.load %arg3[%c4_27, %c0_28] : memref<5x128xf32, #tpu.memory_space<vmem>>, vector<1x8xf32>
    %cst_29 = arith.constant dense<0.000000e+00> : vector<304x8xf32>
    %36 = tpu.matmul %32, %34, %cst_29 {dimension_numbers = #tpu.dot_dimension_numbers<[1], [0], [0], [1], [0, 0, 1, 1], [], []>} : vector<304x32xf32>, vector<32x8xf32>, vector<304x8xf32> -> vector<304x8xf32>
    %37 = vector.broadcast %35 : vector<1x8xf32> to vector<304x8xf32>
    %38 = arith.addf %36, %37 : vector<304x8xf32>
    %c0_30 = arith.constant 0 : index
    %c0_31 = arith.constant 0 : index
    %39 = vector.load %arg4[%c0_30, %c0_31] : memref<304x8xf32, #tpu.memory_space<vmem>>, vector<304x8xf32>
    tpu.vector_store %arg4[%c0_30, %c0_31], %38 {strides = array<i32>} : memref<304x8xf32, #tpu.memory_space<vmem>>, vector<304x8xf32>,
    return
  }
  func.func @transform_0(%arg0: i32) -> (i32, i32) {
    %c0_i32 = arith.constant 0 : i32
    %c0_i32_0 = arith.constant 0 : i32
    return %arg0, %c0_i32 : i32, i32
  }
  func.func @transform_1(%arg0: i32) -> (i32, i32, i32) {
    %c0_i32 = arith.constant 0 : i32
    %c0_i32_0 = arith.constant 0 : i32
    %c0_i32_1 = arith.constant 0 : i32
    %c0_i32_2 = arith.constant 0 : i32
    return %c0_i32, %c0_i32_0, %c0_i32_1 : i32, i32, i32
  }
  func.func @transform_2(%arg0: i32) -> (i32, i32) {
    %c0_i32 = arith.constant 0 : i32
    %c0_i32_0 = arith.constant 0 : i32
    %c0_i32_1 = arith.constant 0 : i32
    return %c0_i32, %c0_i32_0 : i32, i32
  }
  func.func @transform_3(%arg0: i32) -> (i32, i32) {
    %c0_i32 = arith.constant 0 : i32
    %c0_i32_0 = arith.constant 0 : i32
    return %arg0, %c0_i32 : i32, i32
  }
}

</mosaic_0001>

<llo_original>
// kernel: tpu_custom_call.1
$region0: #{tpu_custom_call.1}
  #allocation0 [shape = 'u32[]', space=smem, size = 0x4, offset = 0x4, fixed_abs, tag = 'smem constant byte address 0x4 - core index']
  #allocation1 [shape = 'u32[144,128]{1,0:T(1,128)}', space=vmem, size = 0x12000, scoped, tag = 'internal scratch']
  %s0 = inlined_call_operand.vmem [shape: f32[608,16], index: 0, kind: input, shape index: {}]
  %s1 = inlined_call_operand.vmem [shape: f32[5,128,128], index: 1, kind: input, shape index: {}]
  %s2 = inlined_call_operand.vmem [shape: f32[5,128], index: 2, kind: input, shape index: {}]
  %s3 = inlined_call_operand.vmem [shape: f32[608,8], index: 3, kind: output, shape index: {}]
  %s4 = sld [smem:[#allocation0]]
  $region45: #{tpu_custom_call.1} parent=0
    _
  %s6 = ssub.s32 1, %s4
  %s7 = scalar_select 0, %s6, %s4
  loop: start=0, step=1, limit=4
  $region2: #{tpu_custom_call.1} parent=0 // loop_pre_header
    _
  $region3: #{tpu_custom_call.1} parent=0 // loop_header
    %s9 = sphi 0, %s13
    %p10 = scmp.ge.s32.totalorder %s9, 4
    %s19 = sphi 0, %s21
    %s22 = sphi 0, %s19
    %s23 = sphi 0, %s22
    %s39 = sphi 0, %s23
    %s43 = sphi 0, %s43
    %s45 = sphi 0, %s43
    %s46 = sphi 0, %s45
    %s60 = sphi 0, %s46
    %s64 = sphi 0, %s64
    %s66 = sphi 0, %s64
    %s67 = sphi 0, %s66
    %s81 = sphi 0, %s67
    %s87 = sphi 0, %s89
    %s90 = sphi 0, %s87
    %s91 = sphi 0, %s90
    %s107 = sphi 0, %s91
  $region4: #{tpu_custom_call.1} parent=0 // loop_header_branch
    %12 = sbr.rel (%p10) target = $region8
  $region5: #{tpu_custom_call.1} parent=0 // loop_body
    %s14 = ssub.s32 %s9, 1
    %s15 = ssub.s32 %s9, 2
    %s16 = sadd.s32 %s9, 1
    %s17 = ssub.s32 %s9, %s16
    %p18 = scmp.eq.s32.totalorder %s17, 0
    %s20 = sadd.s32 %s19, 1
    %s21 = scalar_select %p18, %s19, %s20
    %p24 = pneg %p18
    %p25 = scmp.eq.s32.totalorder %s9, 1
    %p26 = por %p24, %p25
    %p27 = scmp.ne.s32.totalorder %s19, %s22
    %p28 = scmp.eq.s32.totalorder %s9, 0
    %p29 = por %p27, %p28
    %p30 = scmp.ne.s32.totalorder %s19, %s22
    %p31 = scmp.eq.s32.totalorder %s14, 1
    %p32 = por %p30, %p31
    %p33 = scmp.ne.s32.totalorder %s22, %s23
    %p34 = scmp.eq.s32.totalorder %s14, 0
    %p35 = por %p33, %p34
    %p36 = scmp.ne.s32.totalorder %s22, %s23
    %p37 = scmp.eq.s32.totalorder %s15, 1
    %p38 = por %p36, %p37
    %p40 = scmp.ne.s32.totalorder %s23, %s39
    %p41 = scmp.eq.s32.totalorder %s15, 0
    %p42 = por %p40, %p41
    %s44 = sadd.s32 %s43, 1
    %p47 = scmp.eq.s32.totalorder %s9, 1
    %p48 = scmp.ne.s32.totalorder %s43, %s45
    %p49 = scmp.eq.s32.totalorder %s9, 0
    %p50 = por %p48, %p49
    %p51 = scmp.ne.s32.totalorder %s43, %s45
    %p52 = scmp.eq.s32.totalorder %s14, 1
    %p53 = por %p51, %p52
    %p54 = scmp.ne.s32.totalorder %s45, %s46
    %p55 = scmp.eq.s32.totalorder %s14, 0
    %p56 = por %p54, %p55
    %p57 = scmp.ne.s32.totalorder %s45, %s46
    %p58 = scmp.eq.s32.totalorder %s15, 1
    %p59 = por %p57, %p58
    %p61 = scmp.ne.s32.totalorder %s46, %s60
    %p62 = scmp.eq.s32.totalorder %s15, 0
    %p63 = por %p61, %p62
    %s65 = sadd.s32 %s64, 1
    %p68 = scmp.eq.s32.totalorder %s9, 1
    %p69 = scmp.ne.s32.totalorder %s64, %s66
    %p70 = scmp.eq.s32.totalorder %s9, 0
    %p71 = por %p69, %p70
    %p72 = scmp.ne.s32.totalorder %s64, %s66
    %p73 = scmp.eq.s32.totalorder %s14, 1
    %p74 = por %p72, %p73
    %p75 = scmp.ne.s32.totalorder %s66, %s67
    %p76 = scmp.eq.s32.totalorder %s14, 0
    %p77 = por %p75, %p76
    %p78 = scmp.ne.s32.totalorder %s66, %s67
    %p79 = scmp.eq.s32.totalorder %s15, 1
    %p80 = por %p78, %p79
    %p82 = scmp.ne.s32.totalorder %s67, %s81
    %p83 = scmp.eq.s32.totalorder %s15, 0
    %p84 = por %p82, %p83
    %s85 = ssub.s32 %s9, %s16
    %p86 = scmp.eq.s32.totalorder %s85, 0
    %s88 = sadd.s32 %s87, 1
    %s89 = scalar_select %p86, %s87, %s88
    %p92 = pneg %p86
    %p93 = scmp.eq.s32.totalorder %s9, 1
    %p94 = por %p92, %p93
    %p95 = scmp.ne.s32.totalorder %s87, %s90
    %p96 = scmp.eq.s32.totalorder %s9, 0
    %p97 = por %p95, %p96
    %p98 = scmp.ne.s32.totalorder %s87, %s90
    %p99 = scmp.eq.s32.totalorder %s14, 1
    %p100 = por %p98, %p99
    %p101 = scmp.ne.s32.totalorder %s90, %s91
    %p102 = scmp.eq.s32.totalorder %s14, 0
    %p103 = por %p101, %p102
    %p104 = scmp.ne.s32.totalorder %s90, %s91
    %p105 = scmp.eq.s32.totalorder %s15, 1
    %p106 = por %p104, %p105
    %p108 = scmp.ne.s32.totalorder %s91, %s107
    %p109 = scmp.eq.s32.totalorder %s15, 0
    %p110 = por %p108, %p109
    %p111 = scmp.le.s32.totalorder 1, %s9
    %p112 = scmp.lt.s32.totalorder %s9, 3
    %p113 = pnand %p111, %p112
    %p114 = pneg %p113
    // Predicated region
    $region9: #{tpu_custom_call.1} parent=5 // pred_check
      _
    $region10: #{tpu_custom_call.1} parent=5 // pred_check_branch
      %116 = sbr.rel (%p113) target = $region12
    $region11: #{tpu_custom_call.1} parent=5 // pred_region
      %s117 = ssub.s32 %s9, 1
      // Predicated region
      $region13: #{tpu_custom_call.1} parent=11 // pred_check
        %p118 = pneg %p56
      $region14: #{tpu_custom_call.1} parent=11 // pred_check_branch
        %120 = sbr.rel (%p118) target = $region16
      $region15: #{tpu_custom_call.1} parent=11 // pred_region
        _
      $region16: #{tpu_custom_call.1} parent=11 // pred_fallthru
        _
      // Predicated region
      $region17: #{tpu_custom_call.1} parent=11 // pred_check
        %p121 = pneg %p77
      $region18: #{tpu_custom_call.1} parent=11 // pred_check_branch
        %123 = sbr.rel (%p121) target = $region20
      $region19: #{tpu_custom_call.1} parent=11 // pred_region
        _
      $region20: #{tpu_custom_call.1} parent=11 // pred_fallthru
        _
    $region12: #{tpu_custom_call.1} parent=5 // pred_fallthru
      _
    %p124 = scmp.lt.s32.totalorder %s9, 2
    // Predicated region
    $region21: #{tpu_custom_call.1} parent=5 // pred_check
      %p125 = pneg %p124
    $region22: #{tpu_custom_call.1} parent=5 // pred_check_branch
      %127 = sbr.rel (%p125) target = $region24
    $region23: #{tpu_custom_call.1} parent=5 // pred_region
      // Predicated region
      $region25: #{tpu_custom_call.1} parent=23 // pred_check
        %p128 = pneg %p29
      $region26: #{tpu_custom_call.1} parent=23 // pred_check_branch
        %130 = sbr.rel (%p128) target = $region28
      $region27: #{tpu_custom_call.1} parent=23 // pred_region
        %s131 = smul.u32 38, %s9
        %p132 = scmp.lt.s32.totalorder %s131, 75
        %s133 = scalar_select %p132, %s131, 75
        %s134 = smul.addr %s133, 8
        %s135 = scalar_lea.vmem %s0, %s134
        %s136 = smul.u32 38, %s9
      $region28: #{tpu_custom_call.1} parent=23 // pred_fallthru
        _
    $region24: #{tpu_custom_call.1} parent=5 // pred_fallthru
      _
    %p137 = scmp.le.s32.totalorder 1, %s9
    %p138 = scmp.lt.s32.totalorder %s9, 3
    %p139 = pnand %p137, %p138
    %p140 = pneg %p139
    // Predicated region
    $region29: #{tpu_custom_call.1} parent=5 // pred_check
      _
    $region30: #{tpu_custom_call.1} parent=5 // pred_check_branch
      %142 = sbr.rel (%p139) target = $region32
    $region31: #{tpu_custom_call.1} parent=5 // pred_region
      %s143 = ssub.s32 %s9, 1
      %s144 = smul.u32 38, %s14
      %p145 = scmp.lt.s32.totalorder %s144, 75
      %s146 = scalar_select %p145, %s144, 75
      %s147 = smul.addr %s146, 8
      %s148 = scalar_lea.vmem %s0, %s147
      %p149 = pneg %p35
      %p150 = pneg %p32
      %p151 = pneg %p56
      %p152 = pneg %p53
      %p153 = pneg %p77
      %p154 = pneg %p74
      %p155 = pneg %p103
      %p156 = pneg %p100
      %s157 = smul.u32 38, %s14
      %p158 = scmp.lt.s32.totalorder %s157, 75
      %s159 = scalar_select %p158, %s157, 75
      %s160 = smul.addr %s159, 8
      %s161 = scalar_lea.vmem %s3, %s160
      %s162 = smul.u32 38, %s14
      %p163 = scmp.lt.s32.totalorder %s162, 75
      %s164 = scalar_select %p163, %s162, 75
      %s165 = smul.addr %s164, 8
      %s166 = scalar_lea.vmem %s0, %s165
      %s167 = smul.u32 38, %s14
      %s168 = smul.u32 38, %s14
      %p169 = scmp.lt.s32.totalorder %s168, 75
      %s170 = scalar_select %p169, %s168, 75
      %s171 = smul.addr %s170, 8
      %s172 = scalar_lea.vmem %s3, %s171
      %s173 = smul.u32 38, %s14
      %v174 = vld [vmem:[%s166] sm:$0xff]
      %v175 = vld [vmem:[%s166 + $0x8] sm:$0xff]
      %v176 = vld [vmem:[%s166 + $0x10] sm:$0xff]
      %v177 = vld [vmem:[%s166 + $0x18] sm:$0xff]
      %v178 = vld [vmem:[%s166 + $0x20] sm:$0xff]
      %v179 = vld [vmem:[%s166 + $0x28] sm:$0xff]
      %v180 = vld [vmem:[%s166 + $0x30] sm:$0xff]
      %v181 = vld [vmem:[%s166 + $0x38] sm:$0xff]
      %v182 = vld [vmem:[%s166 + $0x40] sm:$0xff]
      %v183 = vld [vmem:[%s166 + $0x48] sm:$0xff]
      %v184 = vld [vmem:[%s166 + $0x50] sm:$0xff]
      %v185 = vld [vmem:[%s166 + $0x58] sm:$0xff]
      %v186 = vld [vmem:[%s166 + $0x60] sm:$0xff]
      %v187 = vld [vmem:[%s166 + $0x68] sm:$0xff]
      %v188 = vld [vmem:[%s166 + $0x70] sm:$0xff]
      %v189 = vld [vmem:[%s166 + $0x78] sm:$0xff]
      %v190 = vld [vmem:[%s166 + $0x80] sm:$0xff]
      %v191 = vld [vmem:[%s166 + $0x88] sm:$0xff]
      %v192 = vld [vmem:[%s166 + $0x90] sm:$0xff]
      %v193 = vld [vmem:[%s166 + $0x98] sm:$0xff]
      %v194 = vld [vmem:[%s166 + $0xa0] sm:$0xff]
      %v195 = vld [vmem:[%s166 + $0xa8] sm:$0xff]
      %v196 = vld [vmem:[%s166 + $0xb0] sm:$0xff]
      %v197 = vld [vmem:[%s166 + $0xb8] sm:$0xff]
      %v198 = vld [vmem:[%s166 + $0xc0] sm:$0xff]
      %v199 = vld [vmem:[%s166 + $0xc8] sm:$0xff]
      %v200 = vld [vmem:[%s166 + $0xd0] sm:$0xff]
      %v201 = vld [vmem:[%s166 + $0xd8] sm:$0xff]
      %v202 = vld [vmem:[%s166 + $0xe0] sm:$0xff]
      %v203 = vld [vmem:[%s166 + $0xe8] sm:$0xff]
      %v204 = vld [vmem:[%s166 + $0xf0] sm:$0xff]
      %v205 = vld [vmem:[%s166 + $0xf8] sm:$0xff]
      %v206 = vld [vmem:[%s166 + $0x100] sm:$0xff]
      %v207 = vld [vmem:[%s166 + $0x108] sm:$0xff]
      %v208 = vld [vmem:[%s166 + $0x110] sm:$0xff]
      %v209 = vld [vmem:[%s166 + $0x118] sm:$0xff]
      %v210 = vld [vmem:[%s166 + $0x120] sm:$0xff]
      %v211 = vld [vmem:[%s166 + $0x128] sm:$0xff]
      %v212 = vld [vmem:[%s1] sm:$0xff]
      %v213 = vld [vmem:[%s1 + $0x8] sm:$0xff]
      %v214 = vld [vmem:[%s2] sm:$0x1]
      %v215 = vlaneseq
      %v216 = vshrl.u32 %v215, 7
      %v217 = vsub.s32 0, %v216
      %v218 = vrot.slane %v214, %v217
      %vm219 = vcmask 130048
      %v221 = vsel %vm219, %v174, 0
      %v224 = vsel %vm219, %v175, 0
      %v227 = vsel %vm219, %v176, 0
      %v230 = vsel %vm219, %v177, 0
      %v233 = vsel %vm219, %v178, 0
      %v236 = vsel %vm219, %v179, 0
      %v239 = vsel %vm219, %v180, 0
      %v242 = vsel %vm219, %v181, 0
      %v245 = vsel %vm219, %v182, 0
      %v248 = vsel %vm219, %v183, 0
      %v251 = vsel %vm219, %v184, 0
      %v254 = vsel %vm219, %v185, 0
      %v257 = vsel %vm219, %v186, 0
      %v260 = vsel %vm219, %v187, 0
      %v263 = vsel %vm219, %v188, 0
      %v266 = vsel %vm219, %v189, 0
      %v269 = vsel %vm219, %v190, 0
      %v272 = vsel %vm219, %v191, 0
      %v275 = vsel %vm219, %v192, 0
      %v278 = vsel %vm219, %v193, 0
      %v281 = vsel %vm219, %v194, 0
      %v284 = vsel %vm219, %v195, 0
      %v287 = vsel %vm219, %v196, 0
      %v290 = vsel %vm219, %v197, 0
      %v293 = vsel %vm219, %v198, 0
      %v296 = vsel %vm219, %v199, 0
      %v299 = vsel %vm219, %v200, 0
      %v302 = vsel %vm219, %v201, 0
      %v305 = vsel %vm219, %v202, 0
      %v308 = vsel %vm219, %v203, 0
      %v311 = vsel %vm219, %v204, 0
      %v314 = vsel %vm219, %v205, 0
      %v317 = vsel %vm219, %v206, 0
      %v320 = vsel %vm219, %v207, 0
      %v323 = vsel %vm219, %v208, 0
      %v326 = vsel %vm219, %v209, 0
      %v329 = vsel %vm219, %v210, 0
      %v332 = vsel %vm219, %v211, 0
      %334 = vmatprep.subr.mxu0 0.0
      %335 = vmatpush1.msra.mxu0 0.0
      %336 = vmatprep.subr.mxu0 0.0
      %337 = vmatpush1.msra.mxu0 0.0
      %338 = vmatprep.subr.mxu0 0.0
      %339 = vmatpush1.msra.mxu0 0.0
      %340 = vmatprep.subr.mxu0 0.0
      %341 = vmatpush1.msra.mxu0 0.0
      %342 = vmatprep.subr.mxu0 0.0
      %343 = vmatpush1.msra.mxu0 0.0
      %344 = vmatprep.subr.mxu0 0.0
      %345 = vmatpush1.msra.mxu0 0.0
      %346 = vmatprep.subr.mxu0 0.0
      %347 = vmatpush1.msra.mxu0 0.0
      %348 = vmatprep.subr.mxu0 0.0
      %349 = vmatpush1.msra.mxu0 0.0
      %350 = vmatprep.subr.mxu0 0.0
      %351 = vmatpush1.msra.mxu0 0.0
      %352 = vmatprep.subr.mxu0 0.0
      %353 = vmatpush1.msra.mxu0 0.0
      %354 = vmatprep.subr.mxu0 0.0
      %355 = vmatpush1.msra.mxu0 0.0
      %356 = vmatprep.subr.mxu0 0.0
      %357 = vmatpush1.msra.mxu0 0.0
      %358 = vmatprep.subr.mxu0 0.0
      %359 = vmatpush1.msra.mxu0 0.0
      %360 = vmatprep.subr.mxu0 0.0
      %361 = vmatpush1.msra.mxu0 0.0
      %362 = vmatprep.subr.mxu0 0.0
      %363 = vmatpush1.msra.mxu0 %v213
      %364 = vmatprep.subr.mxu0 0.0
      %365 = vmatpush1.msra.mxu0 %v212
      %366 = vmatprep.subr.mxu0 0.0
      %367 = vmatpush2.msra.mxu0 0.0
      %368 = vmatprep.subr.mxu0 0.0
      %369 = vmatpush2.msra.mxu0 0.0
      %370 = vmatprep.subr.mxu0 0.0
      %371 = vmatpush2.msra.mxu0 0.0
      %372 = vmatprep.subr.mxu0 0.0
      %373 = vmatpush2.msra.mxu0 0.0
      %374 = vmatprep.subr.mxu0 0.0
      %375 = vmatpush2.msra.mxu0 0.0
      %376 = vmatprep.subr.mxu0 0.0
      %377 = vmatpush2.msra.mxu0 0.0
      %378 = vmatprep.subr.mxu0 0.0
      %379 = vmatpush2.msra.mxu0 0.0
      %380 = vmatprep.subr.mxu0 0.0
      %381 = vmatpush2.msra.mxu0 0.0
      %382 = vmatprep.subr.mxu0 0.0
      %383 = vmatpush2.msra.mxu0 0.0
      %384 = vmatprep.subr.mxu0 0.0
      %385 = vmatpush2.msra.mxu0 0.0
      %386 = vmatprep.subr.mxu0 0.0
      %387 = vmatpush2.msra.mxu0 0.0
      %388 = vmatprep.subr.mxu0 0.0
      %389 = vmatpush2.msra.mxu0 0.0
      %390 = vmatprep.subr.mxu0 0.0
      %391 = vmatpush2.msra.mxu0 0.0
      %392 = vmatprep.subr.mxu0 0.0
      %393 = vmatpush2.msra.mxu0 0.0
      %394 = vmatprep.subr.mxu0 0.0
      %395 = vmatpush2.msra.mxu0 0.0
      %396 = vmatprep.subr.mxu0 0.0
      %397 = vmatpush2.msra.mxu0 0.0
      %398 = vmatprep.mubr.f32.mxu0 0.0
      %399 = vmatmul.mubr.f32.gmra.mxu0 %v221
      %v400 = vpop.f32.mrf.mxu0
      %v401 = vadd.f32 %v218, %v400
      %v402 = vpop.f32.mrf.mxu0
      %403 = vmatprep.mubr.f32.mxu0 0.0
      %404 = vmatmul.mubr.f32.gmra.mxu0 %v224
      %v405 = vpop.f32.mrf.mxu0
      %v406 = vadd.f32 %v218, %v405
      %v407 = vpop.f32.mrf.mxu0
      %408 = vmatprep.mubr.f32.mxu0 0.0
      %409 = vmatmul.mubr.f32.gmra.mxu0 %v227
      %v410 = vpop.f32.mrf.mxu0
      %v411 = vadd.f32 %v218, %v410
      %v412 = vpop.f32.mrf.mxu0
      %413 = vmatprep.mubr.f32.mxu0 0.0
      %414 = vmatmul.mubr.f32.gmra.mxu0 %v230
      %v415 = vpop.f32.mrf.mxu0
      %v416 = vadd.f32 %v218, %v415
      %v417 = vpop.f32.mrf.mxu0
      %418 = vmatprep.mubr.f32.mxu0 0.0
      %419 = vmatmul.mubr.f32.gmra.mxu0 %v233
      %v420 = vpop.f32.mrf.mxu0
      %v421 = vadd.f32 %v218, %v420
      %v422 = vpop.f32.mrf.mxu0
      %423 = vmatprep.mubr.f32.mxu0 0.0
      %424 = vmatmul.mubr.f32.gmra.mxu0 %v236
      %v425 = vpop.f32.mrf.mxu0
      %v426 = vadd.f32 %v218, %v425
      %v427 = vpop.f32.mrf.mxu0
      %428 = vmatprep.mubr.f32.mxu0 0.0
      %429 = vmatmul.mubr.f32.gmra.mxu0 %v239
      %v430 = vpop.f32.mrf.mxu0
      %v431 = vadd.f32 %v218, %v430
      %v432 = vpop.f32.mrf.mxu0
      %433 = vmatprep.mubr.f32.mxu0 0.0
      %434 = vmatmul.mubr.f32.gmra.mxu0 %v242
      %v435 = vpop.f32.mrf.mxu0
      %v436 = vadd.f32 %v218, %v435
      %v437 = vpop.f32.mrf.mxu0
      %438 = vmatprep.mubr.f32.mxu0 0.0
      %439 = vmatmul.mubr.f32.gmra.mxu0 %v245
      %v440 = vpop.f32.mrf.mxu0
      %v441 = vadd.f32 %v218, %v440
      %v442 = vpop.f32.mrf.mxu0
      %443 = vmatprep.mubr.f32.mxu0 0.0
      %444 = vmatmul.mubr.f32.gmra.mxu0 %v248
      %v445 = vpop.f32.mrf.mxu0
      %v446 = vadd.f32 %v218, %v445
      %v447 = vpop.f32.mrf.mxu0
      %448 = vmatprep.mubr.f32.mxu0 0.0
      %449 = vmatmul.mubr.f32.gmra.mxu0 %v251
      %v450 = vpop.f32.mrf.mxu0
      %v451 = vadd.f32 %v218, %v450
      %v452 = vpop.f32.mrf.mxu0
      %453 = vmatprep.mubr.f32.mxu0 0.0
      %454 = vmatmul.mubr.f32.gmra.mxu0 %v254
      %v455 = vpop.f32.mrf.mxu0
      %v456 = vadd.f32 %v218, %v455
      %v457 = vpop.f32.mrf.mxu0
      %458 = vmatprep.mubr.f32.mxu0 0.0
      %459 = vmatmul.mubr.f32.gmra.mxu0 %v257
      %v460 = vpop.f32.mrf.mxu0
      %v461 = vadd.f32 %v218, %v460
      %v462 = vpop.f32.mrf.mxu0
      %463 = vmatprep.mubr.f32.mxu0 0.0
      %464 = vmatmul.mubr.f32.gmra.mxu0 %v260
      %v465 = vpop.f32.mrf.mxu0
      %v466 = vadd.f32 %v218, %v465
      %v467 = vpop.f32.mrf.mxu0
      %468 = vmatprep.mubr.f32.mxu0 0.0
      %469 = vmatmul.mubr.f32.gmra.mxu0 %v263
      %v470 = vpop.f32.mrf.mxu0
      %v471 = vadd.f32 %v218, %v470
      %v472 = vpop.f32.mrf.mxu0
      %473 = vmatprep.mubr.f32.mxu0 0.0
      %474 = vmatmul.mubr.f32.gmra.mxu0 %v266
      %v475 = vpop.f32.mrf.mxu0
      %v476 = vadd.f32 %v218, %v475
      %v477 = vpop.f32.mrf.mxu0
      %478 = vmatprep.mubr.f32.mxu0 0.0
      %479 = vmatmul.mubr.f32.gmra.mxu0 %v269
      %v480 = vpop.f32.mrf.mxu0
      %v481 = vadd.f32 %v218, %v480
      %v482 = vpop.f32.mrf.mxu0
      %483 = vmatprep.mubr.f32.mxu0 0.0
      %484 = vmatmul.mubr.f32.gmra.mxu0 %v272
      %v485 = vpop.f32.mrf.mxu0
      %v486 = vadd.f32 %v218, %v485
      %v487 = vpop.f32.mrf.mxu0
      %488 = vmatprep.mubr.f32.mxu0 0.0
      %489 = vmatmul.mubr.f32.gmra.mxu0 %v275
      %v490 = vpop.f32.mrf.mxu0
      %v491 = vadd.f32 %v218, %v490
      %v492 = vpop.f32.mrf.mxu0
      %493 = vmatprep.mubr.f32.mxu0 0.0
      %494 = vmatmul.mubr.f32.gmra.mxu0 %v278
      %v495 = vpop.f32.mrf.mxu0
      %v496 = vadd.f32 %v218, %v495
      %v497 = vpop.f32.mrf.mxu0
      %498 = vmatprep.mubr.f32.mxu0 0.0
      %499 = vmatmul.mubr.f32.gmra.mxu0 %v281
      %v500 = vpop.f32.mrf.mxu0
      %v501 = vadd.f32 %v218, %v500
      %v502 = vpop.f32.mrf.mxu0
      %503 = vmatprep.mubr.f32.mxu0 0.0
      %504 = vmatmul.mubr.f32.gmra.mxu0 %v284
      %v505 = vpop.f32.mrf.mxu0
      %v506 = vadd.f32 %v218, %v505
      %v507 = vpop.f32.mrf.mxu0
      %508 = vmatprep.mubr.f32.mxu0 0.0
      %509 = vmatmul.mubr.f32.gmra.mxu0 %v287
      %v510 = vpop.f32.mrf.mxu0
      %v511 = vadd.f32 %v218, %v510
      %v512 = vpop.f32.mrf.mxu0
      %513 = vmatprep.mubr.f32.mxu0 0.0
      %514 = vmatmul.mubr.f32.gmra.mxu0 %v290
      %v515 = vpop.f32.mrf.mxu0
      %v516 = vadd.f32 %v218, %v515
      %v517 = vpop.f32.mrf.mxu0
      %518 = vmatprep.mubr.f32.mxu0 0.0
      %519 = vmatmul.mubr.f32.gmra.mxu0 %v293
      %v520 = vpop.f32.mrf.mxu0
      %v521 = vadd.f32 %v218, %v520
      %v522 = vpop.f32.mrf.mxu0
      %523 = vmatprep.mubr.f32.mxu0 0.0
      %524 = vmatmul.mubr.f32.gmra.mxu0 %v296
      %v525 = vpop.f32.mrf.mxu0
      %v526 = vadd.f32 %v218, %v525
      %v527 = vpop.f32.mrf.mxu0
      %528 = vmatprep.mubr.f32.mxu0 0.0
      %529 = vmatmul.mubr.f32.gmra.mxu0 %v299
      %v530 = vpop.f32.mrf.mxu0
      %v531 = vadd.f32 %v218, %v530
      %v532 = vpop.f32.mrf.mxu0
      %533 = vmatprep.mubr.f32.mxu0 0.0
      %534 = vmatmul.mubr.f32.gmra.mxu0 %v302
      %v535 = vpop.f32.mrf.mxu0
      %v536 = vadd.f32 %v218, %v535
      %v537 = vpop.f32.mrf.mxu0
      %538 = vmatprep.mubr.f32.mxu0 0.0
      %539 = vmatmul.mubr.f32.gmra.mxu0 %v305
      %v540 = vpop.f32.mrf.mxu0
      %v541 = vadd.f32 %v218, %v540
      %v542 = vpop.f32.mrf.mxu0
      %543 = vmatprep.mubr.f32.mxu0 0.0
      %544 = vmatmul.mubr.f32.gmra.mxu0 %v308
      %v545 = vpop.f32.mrf.mxu0
      %v546 = vadd.f32 %v218, %v545
      %v547 = vpop.f32.mrf.mxu0
      %548 = vmatprep.mubr.f32.mxu0 0.0
      %549 = vmatmul.mubr.f32.gmra.mxu0 %v311
      %v550 = vpop.f32.mrf.mxu0
      %v551 = vadd.f32 %v218, %v550
      %v552 = vpop.f32.mrf.mxu0
      %553 = vmatprep.mubr.f32.mxu0 0.0
      %554 = vmatmul.mubr.f32.gmra.mxu0 %v314
      %v555 = vpop.f32.mrf.mxu0
      %v556 = vadd.f32 %v218, %v555
      %v557 = vpop.f32.mrf.mxu0
      %558 = vmatprep.mubr.f32.mxu0 0.0
      %559 = vmatmul.mubr.f32.gmra.mxu0 %v317
      %v560 = vpop.f32.mrf.mxu0
      %v561 = vadd.f32 %v218, %v560
      %v562 = vpop.f32.mrf.mxu0
      %563 = vmatprep.mubr.f32.mxu0 0.0
      %564 = vmatmul.mubr.f32.gmra.mxu0 %v320
      %v565 = vpop.f32.mrf.mxu0
      %v566 = vadd.f32 %v218, %v565
      %v567 = vpop.f32.mrf.mxu0
      %568 = vmatprep.mubr.f32.mxu0 0.0
      %569 = vmatmul.mubr.f32.gmra.mxu0 %v323
      %v570 = vpop.f32.mrf.mxu0
      %v571 = vadd.f32 %v218, %v570
      %v572 = vpop.f32.mrf.mxu0
      %573 = vmatprep.mubr.f32.mxu0 0.0
      %574 = vmatmul.mubr.f32.gmra.mxu0 %v326
      %v575 = vpop.f32.mrf.mxu0
      %v576 = vadd.f32 %v218, %v575
      %v577 = vpop.f32.mrf.mxu0
      %578 = vmatprep.mubr.f32.mxu0 0.0
      %579 = vmatmul.mubr.f32.gmra.mxu0 %v329
      %v580 = vpop.f32.mrf.mxu0
      %v581 = vadd.f32 %v218, %v580
      %v582 = vpop.f32.mrf.mxu0
      %583 = vmatprep.mubr.f32.mxu0 0.0
      %584 = vmatmul.mubr.f32.gmra.mxu0 %v332
      %v585 = vpop.f32.mrf.mxu0
      %v586 = vadd.f32 %v218, %v585
      %v587 = vpop.f32.mrf.mxu0
      %588 = vdwg.mxu0
      %v589 = vmax.f32 %v401, 0.0
      %v590 = vmax.f32 %v406, 0.0
      %v591 = vmax.f32 %v411, 0.0
      %v592 = vmax.f32 %v416, 0.0
      %v593 = vmax.f32 %v421, 0.0
      %v594 = vmax.f32 %v426, 0.0
      %v595 = vmax.f32 %v431, 0.0
      %v596 = vmax.f32 %v436, 0.0
      %v597 = vmax.f32 %v441, 0.0
      %v598 = vmax.f32 %v446, 0.0
      %v599 = vmax.f32 %v451, 0.0
      %v600 = vmax.f32 %v456, 0.0
      %v601 = vmax.f32 %v461, 0.0
      %v602 = vmax.f32 %v466, 0.0
      %v603 = vmax.f32 %v471, 0.0
      %v604 = vmax.f32 %v476, 0.0
      %v605 = vmax.f32 %v481, 0.0
      %v606 = vmax.f32 %v486, 0.0
      %v607 = vmax.f32 %v491, 0.0
      %v608 = vmax.f32 %v496, 0.0
      %v609 = vmax.f32 %v501, 0.0
      %v610 = vmax.f32 %v506, 0.0
      %v611 = vmax.f32 %v511, 0.0
      %v612 = vmax.f32 %v516, 0.0
      %v613 = vmax.f32 %v521, 0.0
      %v614 = vmax.f32 %v526, 0.0
      %v615 = vmax.f32 %v531, 0.0
      %v616 = vmax.f32 %v536, 0.0
      %v617 = vmax.f32 %v541, 0.0
      %v618 = vmax.f32 %v546, 0.0
      %v619 = vmax.f32 %v551, 0.0
      %v620 = vmax.f32 %v556, 0.0
      %v621 = vmax.f32 %v561, 0.0
      %v622 = vmax.f32 %v566, 0.0
      %v623 = vmax.f32 %v571, 0.0
      %v624 = vmax.f32 %v576, 0.0
      %v625 = vmax.f32 %v581, 0.0
      %v626 = vmax.f32 %v586, 0.0
      %s627 = scalar_lea.vmem %s1, 128
      %v628 = vld [vmem:[%s627] sm:$0xff]
      %v629 = vld [vmem:[%s627 + $0x8] sm:$0xff]
      %v630 = vld [vmem:[%s627 + $0x10] sm:$0xff]
      %v631 = vld [vmem:[%s627 + $0x18] sm:$0xff]
      %v632 = vld [vmem:[%s627 + $0x20] sm:$0xff]
      %v633 = vld [vmem:[%s627 + $0x28] sm:$0xff]
      %v634 = vld [vmem:[%s627 + $0x30] sm:$0xff]
      %v635 = vld [vmem:[%s627 + $0x38] sm:$0xff]
      %v636 = vld [vmem:[%s627 + $0x40] sm:$0xff]
      %v637 = vld [vmem:[%s627 + $0x48] sm:$0xff]
      %v638 = vld [vmem:[%s627 + $0x50] sm:$0xff]
      %v639 = vld [vmem:[%s627 + $0x58] sm:$0xff]
      %v640 = vld [vmem:[%s627 + $0x60] sm:$0xff]
      %v641 = vld [vmem:[%s627 + $0x68] sm:$0xff]
      %v642 = vld [vmem:[%s627 + $0x70] sm:$0xff]
      %v643 = vld [vmem:[%s627 + $0x78] sm:$0xff]
      %v644 = vld [vmem:[%s2 + $0x1] sm:$0x1]
      %v645 = vlaneseq
      %v646 = vshrl.u32 %v645, 7
      %v647 = vsub.s32 0, %v646
      %v648 = vrot.slane %v644, %v647
      %649 = vmatprep.subr.mxu0 0.0
      %650 = vmatpush1.msra.mxu0 %v643
      %651 = vmatprep.subr.mxu0 0.0
      %652 = vmatpush1.msra.mxu0 %v642
      %653 = vmatprep.subr.mxu0 0.0
      %654 = vmatpush1.msra.mxu0 %v641
      %655 = vmatprep.subr.mxu0 0.0
      %656 = vmatpush1.msra.mxu0 %v640
      %657 = vmatprep.subr.mxu0 0.0
      %658 = vmatpush1.msra.mxu0 %v639
      %659 = vmatprep.subr.mxu0 0.0
      %660 = vmatpush1.msra.mxu0 %v638
      %661 = vmatprep.subr.mxu0 0.0
      %662 = vmatpush1.msra.mxu0 %v637
      %663 = vmatprep.subr.mxu0 0.0
      %664 = vmatpush1.msra.mxu0 %v636
      %665 = vmatprep.subr.mxu0 0.0
      %666 = vmatpush1.msra.mxu0 %v635
      %667 = vmatprep.subr.mxu0 0.0
      %668 = vmatpush1.msra.mxu0 %v634
      %669 = vmatprep.subr.mxu0 0.0
      %670 = vmatpush1.msra.mxu0 %v633
      %671 = vmatprep.subr.mxu0 0.0
      %672 = vmatpush1.msra.mxu0 %v632
      %673 = vmatprep.subr.mxu0 0.0
      %674 = vmatpush1.msra.mxu0 %v631
      %675 = vmatprep.subr.mxu0 0.0
      %676 = vmatpush1.msra.mxu0 %v630
      %677 = vmatprep.subr.mxu0 0.0
      %678 = vmatpush1.msra.mxu0 %v629
      %679 = vmatprep.subr.mxu0 0.0
      %680 = vmatpush1.msra.mxu0 %v628
      %681 = vmatprep.subr.mxu0 0.0
      %682 = vmatpush2.msra.mxu0 0.0
      %683 = vmatprep.subr.mxu0 0.0
      %684 = vmatpush2.msra.mxu0 0.0
      %685 = vmatprep.subr.mxu0 0.0
      %686 = vmatpush2.msra.mxu0 0.0
      %687 = vmatprep.subr.mxu0 0.0
      %688 = vmatpush2.msra.mxu0 0.0
      %689 = vmatprep.subr.mxu0 0.0
      %690 = vmatpush2.msra.mxu0 0.0
      %691 = vmatprep.subr.mxu0 0.0
      %692 = vmatpush2.msra.mxu0 0.0
      %693 = vmatprep.subr.mxu0 0.0
      %694 = vmatpush2.msra.mxu0 0.0
      %695 = vmatprep.subr.mxu0 0.0
      %696 = vmatpush2.msra.mxu0 0.0
      %697 = vmatprep.subr.mxu0 0.0
      %698 = vmatpush2.msra.mxu0 0.0
      %699 = vmatprep.subr.mxu0 0.0
      %700 = vmatpush2.msra.mxu0 0.0
      %701 = vmatprep.subr.mxu0 0.0
      %702 = vmatpush2.msra.mxu0 0.0
      %703 = vmatprep.subr.mxu0 0.0
      %704 = vmatpush2.msra.mxu0 0.0
      %705 = vmatprep.subr.mxu0 0.0
      %706 = vmatpush2.msra.mxu0 0.0
      %707 = vmatprep.subr.mxu0 0.0
      %708 = vmatpush2.msra.mxu0 0.0
      %709 = vmatprep.subr.mxu0 0.0
      %710 = vmatpush2.msra.mxu0 0.0
      %711 = vmatprep.subr.mxu0 0.0
      %712 = vmatpush2.msra.mxu0 0.0
      %713 = vmatprep.mubr.f32.mxu0 0.0
      %714 = vmatmul.mubr.f32.gmra.mxu0 %v589
      %v715 = vpop.f32.mrf.mxu0
      %v716 = vadd.f32 %v648, %v715
      %v717 = vpop.f32.mrf.mxu0
      %718 = vmatprep.mubr.f32.mxu0 0.0
      %719 = vmatmul.mubr.f32.gmra.mxu0 %v590
      %v720 = vpop.f32.mrf.mxu0
      %v721 = vadd.f32 %v648, %v720
      %v722 = vpop.f32.mrf.mxu0
      %723 = vmatprep.mubr.f32.mxu0 0.0
      %724 = vmatmul.mubr.f32.gmra.mxu0 %v591
      %v725 = vpop.f32.mrf.mxu0
      %v726 = vadd.f32 %v648, %v725
      %v727 = vpop.f32.mrf.mxu0
      %728 = vmatprep.mubr.f32.mxu0 0.0
      %729 = vmatmul.mubr.f32.gmra.mxu0 %v592
      %v730 = vpop.f32.mrf.mxu0
      %v731 = vadd.f32 %v648, %v730
      %v732 = vpop.f32.mrf.mxu0
      %733 = vmatprep.mubr.f32.mxu0 0.0
      %734 = vmatmul.mubr.f32.gmra.mxu0 %v593
      %v735 = vpop.f32.mrf.mxu0
      %v736 = vadd.f32 %v648, %v735
      %v737 = vpop.f32.mrf.mxu0
      %738 = vmatprep.mubr.f32.mxu0 0.0
      %739 = vmatmul.mubr.f32.gmra.mxu0 %v594
      %v740 = vpop.f32.mrf.mxu0
      %v741 = vadd.f32 %v648, %v740
      %v742 = vpop.f32.mrf.mxu0
      %743 = vmatprep.mubr.f32.mxu0 0.0
      %744 = vmatmul.mubr.f32.gmra.mxu0 %v595
      %v745 = vpop.f32.mrf.mxu0
      %v746 = vadd.f32 %v648, %v745
      %v747 = vpop.f32.mrf.mxu0
      %748 = vmatprep.mubr.f32.mxu0 0.0
      %749 = vmatmul.mubr.f32.gmra.mxu0 %v596
      %v750 = vpop.f32.mrf.mxu0
      %v751 = vadd.f32 %v648, %v750
      %v752 = vpop.f32.mrf.mxu0
      %753 = vmatprep.mubr.f32.mxu0 0.0
      %754 = vmatmul.mubr.f32.gmra.mxu0 %v597
      %v755 = vpop.f32.mrf.mxu0
      %v756 = vadd.f32 %v648, %v755
      %v757 = vpop.f32.mrf.mxu0
      %758 = vmatprep.mubr.f32.mxu0 0.0
      %759 = vmatmul.mubr.f32.gmra.mxu0 %v598
      %v760 = vpop.f32.mrf.mxu0
      %v761 = vadd.f32 %v648, %v760
      %v762 = vpop.f32.mrf.mxu0
      %763 = vmatprep.mubr.f32.mxu0 0.0
      %764 = vmatmul.mubr.f32.gmra.mxu0 %v599
      %v765 = vpop.f32.mrf.mxu0
      %v766 = vadd.f32 %v648, %v765
      %v767 = vpop.f32.mrf.mxu0
      %768 = vmatprep.mubr.f32.mxu0 0.0
      %769 = vmatmul.mubr.f32.gmra.mxu0 %v600
      %v770 = vpop.f32.mrf.mxu0
      %v771 = vadd.f32 %v648, %v770
      %v772 = vpop.f32.mrf.mxu0
      %773 = vmatprep.mubr.f32.mxu0 0.0
      %774 = vmatmul.mubr.f32.gmra.mxu0 %v601
      %v775 = vpop.f32.mrf.mxu0
      %v776 = vadd.f32 %v648, %v775
      %v777 = vpop.f32.mrf.mxu0
      %778 = vmatprep.mubr.f32.mxu0 0.0
      %779 = vmatmul.mubr.f32.gmra.mxu0 %v602
      %v780 = vpop.f32.mrf.mxu0
      %v781 = vadd.f32 %v648, %v780
      %v782 = vpop.f32.mrf.mxu0
      %783 = vmatprep.mubr.f32.mxu0 0.0
      %784 = vmatmul.mubr.f32.gmra.mxu0 %v603
      %v785 = vpop.f32.mrf.mxu0
      %v786 = vadd.f32 %v648, %v785
      %v787 = vpop.f32.mrf.mxu0
      %788 = vmatprep.mubr.f32.mxu0 0.0
      %789 = vmatmul.mubr.f32.gmra.mxu0 %v604
      %v790 = vpop.f32.mrf.mxu0
      %v791 = vadd.f32 %v648, %v790
      %v792 = vpop.f32.mrf.mxu0
      %793 = vmatprep.mubr.f32.mxu0 0.0
      %794 = vmatmul.mubr.f32.gmra.mxu0 %v605
      %v795 = vpop.f32.mrf.mxu0
      %v796 = vadd.f32 %v648, %v795
      %v797 = vpop.f32.mrf.mxu0
      %798 = vmatprep.mubr.f32.mxu0 0.0
      %799 = vmatmul.mubr.f32.gmra.mxu0 %v606
      %v800 = vpop.f32.mrf.mxu0
      %v801 = vadd.f32 %v648, %v800
      %v802 = vpop.f32.mrf.mxu0
      %803 = vmatprep.mubr.f32.mxu0 0.0
      %804 = vmatmul.mubr.f32.gmra.mxu0 %v607
      %v805 = vpop.f32.mrf.mxu0
      %v806 = vadd.f32 %v648, %v805
      %v807 = vpop.f32.mrf.mxu0
      %808 = vmatprep.mubr.f32.mxu0 0.0
      %809 = vmatmul.mubr.f32.gmra.mxu0 %v608
      %v810 = vpop.f32.mrf.mxu0
      %v811 = vadd.f32 %v648, %v810
      %v812 = vpop.f32.mrf.mxu0
      %813 = vmatprep.mubr.f32.mxu0 0.0
      %814 = vmatmul.mubr.f32.gmra.mxu0 %v609
      %v815 = vpop.f32.mrf.mxu0
      %v816 = vadd.f32 %v648, %v815
      %v817 = vpop.f32.mrf.mxu0
      %818 = vmatprep.mubr.f32.mxu0 0.0
      %819 = vmatmul.mubr.f32.gmra.mxu0 %v610
      %v820 = vpop.f32.mrf.mxu0
      %v821 = vadd.f32 %v648, %v820
      %v822 = vpop.f32.mrf.mxu0
      %823 = vmatprep.mubr.f32.mxu0 0.0
      %824 = vmatmul.mubr.f32.gmra.mxu0 %v611
      %v825 = vpop.f32.mrf.mxu0
      %v826 = vadd.f32 %v648, %v825
      %v827 = vpop.f32.mrf.mxu0
      %828 = vmatprep.mubr.f32.mxu0 0.0
      %829 = vmatmul.mubr.f32.gmra.mxu0 %v612
      %v830 = vpop.f32.mrf.mxu0
      %v831 = vadd.f32 %v648, %v830
      %v832 = vpop.f32.mrf.mxu0
      %833 = vmatprep.mubr.f32.mxu0 0.0
      %834 = vmatmul.mubr.f32.gmra.mxu0 %v613
      %v835 = vpop.f32.mrf.mxu0
      %v836 = vadd.f32 %v648, %v835
      %v837 = vpop.f32.mrf.mxu0
      %838 = vmatprep.mubr.f32.mxu0 0.0
      %839 = vmatmul.mubr.f32.gmra.mxu0 %v614
      %v840 = vpop.f32.mrf.mxu0
      %v841 = vadd.f32 %v648, %v840
      %v842 = vpop.f32.mrf.mxu0
      %843 = vmatprep.mubr.f32.mxu0 0.0
      %844 = vmatmul.mubr.f32.gmra.mxu0 %v615
      %v845 = vpop.f32.mrf.mxu0
      %v846 = vadd.f32 %v648, %v845
      %v847 = vpop.f32.mrf.mxu0
      %848 = vmatprep.mubr.f32.mxu0 0.0
      %849 = vmatmul.mubr.f32.gmra.mxu0 %v616
      %v850 = vpop.f32.mrf.mxu0
      %v851 = vadd.f32 %v648, %v850
      %v852 = vpop.f32.mrf.mxu0
      %853 = vmatprep.mubr.f32.mxu0 0.0
      %854 = vmatmul.mubr.f32.gmra.mxu0 %v617
      %v855 = vpop.f32.mrf.mxu0
      %v856 = vadd.f32 %v648, %v855
      %v857 = vpop.f32.mrf.mxu0
      %858 = vmatprep.mubr.f32.mxu0 0.0
      %859 = vmatmul.mubr.f32.gmra.mxu0 %v618
      %v860 = vpop.f32.mrf.mxu0
      %v861 = vadd.f32 %v648, %v860
      %v862 = vpop.f32.mrf.mxu0
      %863 = vmatprep.mubr.f32.mxu0 0.0
      %864 = vmatmul.mubr.f32.gmra.mxu0 %v619
      %v865 = vpop.f32.mrf.mxu0
      %v866 = vadd.f32 %v648, %v865
      %v867 = vpop.f32.mrf.mxu0
      %868 = vmatprep.mubr.f32.mxu0 0.0
      %869 = vmatmul.mubr.f32.gmra.mxu0 %v620
      %v870 = vpop.f32.mrf.mxu0
      %v871 = vadd.f32 %v648, %v870
      %v872 = vpop.f32.mrf.mxu0
      %873 = vmatprep.mubr.f32.mxu0 0.0
      %874 = vmatmul.mubr.f32.gmra.mxu0 %v621
      %v875 = vpop.f32.mrf.mxu0
      %v876 = vadd.f32 %v648, %v875
      %v877 = vpop.f32.mrf.mxu0
      %878 = vmatprep.mubr.f32.mxu0 0.0
      %879 = vmatmul.mubr.f32.gmra.mxu0 %v622
      %v880 = vpop.f32.mrf.mxu0
      %v881 = vadd.f32 %v648, %v880
      %v882 = vpop.f32.mrf.mxu0
      %883 = vmatprep.mubr.f32.mxu0 0.0
      %884 = vmatmul.mubr.f32.gmra.mxu0 %v623
      %v885 = vpop.f32.mrf.mxu0
      %v886 = vadd.f32 %v648, %v885
      %v887 = vpop.f32.mrf.mxu0
      %888 = vmatprep.mubr.f32.mxu0 0.0
      %889 = vmatmul.mubr.f32.gmra.mxu0 %v624
      %v890 = vpop.f32.mrf.mxu0
      %v891 = vadd.f32 %v648, %v890
      %v892 = vpop.f32.mrf.mxu0
      %893 = vmatprep.mubr.f32.mxu0 0.0
      %894 = vmatmul.mubr.f32.gmra.mxu0 %v625
      %v895 = vpop.f32.mrf.mxu0
      %v896 = vadd.f32 %v648, %v895
      %v897 = vpop.f32.mrf.mxu0
      %898 = vmatprep.mubr.f32.mxu0 0.0
      %899 = vmatmul.mubr.f32.gmra.mxu0 %v626
      %v900 = vpop.f32.mrf.mxu0
      %v901 = vadd.f32 %v648, %v900
      %v902 = vpop.f32.mrf.mxu0
      %903 = vdwg.mxu0
      %v904 = vmax.f32 %v716, 0.0
      %v905 = vmax.f32 %v721, 0.0
      %v906 = vmax.f32 %v726, 0.0
      %v907 = vmax.f32 %v731, 0.0
      %v908 = vmax.f32 %v736, 0.0
      %v909 = vmax.f32 %v741, 0.0
      %v910 = vmax.f32 %v746, 0.0
      %v911 = vmax.f32 %v751, 0.0
      %v912 = vmax.f32 %v756, 0.0
      %v913 = vmax.f32 %v761, 0.0
      %v914 = vmax.f32 %v766, 0.0
      %v915 = vmax.f32 %v771, 0.0
      %v916 = vmax.f32 %v776, 0.0
      %v917 = vmax.f32 %v781, 0.0
      %v918 = vmax.f32 %v786, 0.0
      %v919 = vmax.f32 %v791, 0.0
      %v920 = vmax.f32 %v796, 0.0
      %v921 = vmax.f32 %v801, 0.0
      %v922 = vmax.f32 %v806, 0.0
      %v923 = vmax.f32 %v811, 0.0
      %v924 = vmax.f32 %v816, 0.0
      %v925 = vmax.f32 %v821, 0.0
      %v926 = vmax.f32 %v826, 0.0
      %v927 = vmax.f32 %v831, 0.0
      %v928 = vmax.f32 %v836, 0.0
      %v929 = vmax.f32 %v841, 0.0
      %v930 = vmax.f32 %v846, 0.0
      %v931 = vmax.f32 %v851, 0.0
      %v932 = vmax.f32 %v856, 0.0
      %v933 = vmax.f32 %v861, 0.0
      %v934 = vmax.f32 %v866, 0.0
      %v935 = vmax.f32 %v871, 0.0
      %v936 = vmax.f32 %v876, 0.0
      %v937 = vmax.f32 %v881, 0.0
      %v938 = vmax.f32 %v886, 0.0
      %v939 = vmax.f32 %v891, 0.0
      %v940 = vmax.f32 %v896, 0.0
      %v941 = vmax.f32 %v901, 0.0
      %s942 = scalar_lea.vmem %s1, 256
      %v943 = vld [vmem:[%s942] sm:$0xff]
      %v944 = vld [vmem:[%s942 + $0x8] sm:$0xff]
      %v945 = vld [vmem:[%s942 + $0x10] sm:$0xff]
      %v946 = vld [vmem:[%s942 + $0x18] sm:$0xff]
      %v947 = vld [vmem:[%s942 + $0x20] sm:$0xff]
      %v948 = vld [vmem:[%s942 + $0x28] sm:$0xff]
      %v949 = vld [vmem:[%s942 + $0x30] sm:$0xff]
      %v950 = vld [vmem:[%s942 + $0x38] sm:$0xff]
      %v951 = vld [vmem:[%s942 + $0x40] sm:$0xff]
      %v952 = vld [vmem:[%s942 + $0x48] sm:$0xff]
      %v953 = vld [vmem:[%s942 + $0x50] sm:$0xff]
      %v954 = vld [vmem:[%s942 + $0x58] sm:$0xff]
      %v955 = vld [vmem:[%s942 + $0x60] sm:$0xff]
      %v956 = vld [vmem:[%s942 + $0x68] sm:$0xff]
      %v957 = vld [vmem:[%s942 + $0x70] sm:$0xff]
      %v958 = vld [vmem:[%s942 + $0x78] sm:$0xff]
      %v959 = vld [vmem:[%s2 + $0x2] sm:$0x1]
      %v960 = vlaneseq
      %v961 = vshrl.u32 %v960, 7
      %v962 = vsub.s32 0, %v961
      %v963 = vrot.slane %v959, %v962
      %964 = vmatprep.subr.mxu0 0.0
      %965 = vmatpush1.msra.mxu0 %v958
      %966 = vmatprep.subr.mxu0 0.0
      %967 = vmatpush1.msra.mxu0 %v957
      %968 = vmatprep.subr.mxu0 0.0
      %969 = vmatpush1.msra.mxu0 %v956
      %970 = vmatprep.subr.mxu0 0.0
      %971 = vmatpush1.msra.mxu0 %v955
      %972 = vmatprep.subr.mxu0 0.0
      %973 = vmatpush1.msra.mxu0 %v954
      %974 = vmatprep.subr.mxu0 0.0
      %975 = vmatpush1.msra.mxu0 %v953
      %976 = vmatprep.subr.mxu0 0.0
      %977 = vmatpush1.msra.mxu0 %v952
      %978 = vmatprep.subr.mxu0 0.0
      %979 = vmatpush1.msra.mxu0 %v951
      %980 = vmatprep.subr.mxu0 0.0
      %981 = vmatpush1.msra.mxu0 %v950
      %982 = vmatprep.subr.mxu0 0.0
      %983 = vmatpush1.msra.mxu0 %v949
      %984 = vmatprep.subr.mxu0 0.0
      %985 = vmatpush1.msra.mxu0 %v948
      %986 = vmatprep.subr.mxu0 0.0
      %987 = vmatpush1.msra.mxu0 %v947
      %988 = vmatprep.subr.mxu0 0.0
      %989 = vmatpush1.msra.mxu0 %v946
      %990 = vmatprep.subr.mxu0 0.0
      %991 = vmatpush1.msra.mxu0 %v945
      %992 = vmatprep.subr.mxu0 0.0
      %993 = vmatpush1.msra.mxu0 %v944
      %994 = vmatprep.subr.mxu0 0.0
      %995 = vmatpush1.msra.mxu0 %v943
      %996 = vmatprep.subr.mxu0 0.0
      %997 = vmatpush2.msra.mxu0 0.0
      %998 = vmatprep.subr.mxu0 0.0
      %999 = vmatpush2.msra.mxu0 0.0
      %1000 = vmatprep.subr.mxu0 0.0
      %1001 = vmatpush2.msra.mxu0 0.0
      %1002 = vmatprep.subr.mxu0 0.0
      %1003 = vmatpush2.msra.mxu0 0.0
      %1004 = vmatprep.subr.mxu0 0.0
      %1005 = vmatpush2.msra.mxu0 0.0
      %1006 = vmatprep.subr.mxu0 0.0
      %1007 = vmatpush2.msra.mxu0 0.0
      %1008 = vmatprep.subr.mxu0 0.0
      %1009 = vmatpush2.msra.mxu0 0.0
      %1010 = vmatprep.subr.mxu0 0.0
      %1011 = vmatpush2.msra.mxu0 0.0
      %1012 = vmatprep.subr.mxu0 0.0
      %1013 = vmatpush2.msra.mxu0 0.0
      %1014 = vmatprep.subr.mxu0 0.0
      %1015 = vmatpush2.msra.mxu0 0.0
      %1016 = vmatprep.subr.mxu0 0.0
      %1017 = vmatpush2.msra.mxu0 0.0
      %1018 = vmatprep.subr.mxu0 0.0
      %1019 = vmatpush2.msra.mxu0 0.0
      %1020 = vmatprep.subr.mxu0 0.0
      %1021 = vmatpush2.msra.mxu0 0.0
      %1022 = vmatprep.subr.mxu0 0.0
      %1023 = vmatpush2.msra.mxu0 0.0
      %1024 = vmatprep.subr.mxu0 0.0
      %1025 = vmatpush2.msra.mxu0 0.0
      %1026 = vmatprep.subr.mxu0 0.0
      %1027 = vmatpush2.msra.mxu0 0.0
      %1028 = vmatprep.mubr.f32.mxu0 0.0
      %1029 = vmatmul.mubr.f32.gmra.mxu0 %v904
      %v1030 = vpop.f32.mrf.mxu0
      %v1031 = vadd.f32 %v963, %v1030
      %v1032 = vpop.f32.mrf.mxu0
      %1033 = vmatprep.mubr.f32.mxu0 0.0
      %1034 = vmatmul.mubr.f32.gmra.mxu0 %v905
      %v1035 = vpop.f32.mrf.mxu0
      %v1036 = vadd.f32 %v963, %v1035
      %v1037 = vpop.f32.mrf.mxu0
      %1038 = vmatprep.mubr.f32.mxu0 0.0
      %1039 = vmatmul.mubr.f32.gmra.mxu0 %v906
      %v1040 = vpop.f32.mrf.mxu0
      %v1041 = vadd.f32 %v963, %v1040
      %v1042 = vpop.f32.mrf.mxu0
      %1043 = vmatprep.mubr.f32.mxu0 0.0
      %1044 = vmatmul.mubr.f32.gmra.mxu0 %v907
      %v1045 = vpop.f32.mrf.mxu0
      %v1046 = vadd.f32 %v963, %v1045
      %v1047 = vpop.f32.mrf.mxu0
      %1048 = vmatprep.mubr.f32.mxu0 0.0
      %1049 = vmatmul.mubr.f32.gmra.mxu0 %v908
      %v1050 = vpop.f32.mrf.mxu0
      %v1051 = vadd.f32 %v963, %v1050
      %v1052 = vpop.f32.mrf.mxu0
      %1053 = vmatprep.mubr.f32.mxu0 0.0
      %1054 = vmatmul.mubr.f32.gmra.mxu0 %v909
      %v1055 = vpop.f32.mrf.mxu0
      %v1056 = vadd.f32 %v963, %v1055
      %v1057 = vpop.f32.mrf.mxu0
      %1058 = vmatprep.mubr.f32.mxu0 0.0
      %1059 = vmatmul.mubr.f32.gmra.mxu0 %v910
      %v1060 = vpop.f32.mrf.mxu0
      %v1061 = vadd.f32 %v963, %v1060
      %v1062 = vpop.f32.mrf.mxu0
      %1063 = vmatprep.mubr.f32.mxu0 0.0
      %1064 = vmatmul.mubr.f32.gmra.mxu0 %v911
      %v1065 = vpop.f32.mrf.mxu0
      %v1066 = vadd.f32 %v963, %v1065
      %v1067 = vpop.f32.mrf.mxu0
      %1068 = vmatprep.mubr.f32.mxu0 0.0
      %1069 = vmatmul.mubr.f32.gmra.mxu0 %v912
      %v1070 = vpop.f32.mrf.mxu0
      %v1071 = vadd.f32 %v963, %v1070
      %v1072 = vpop.f32.mrf.mxu0
      %1073 = vmatprep.mubr.f32.mxu0 0.0
      %1074 = vmatmul.mubr.f32.gmra.mxu0 %v913
      %v1075 = vpop.f32.mrf.mxu0
      %v1076 = vadd.f32 %v963, %v1075
      %v1077 = vpop.f32.mrf.mxu0
      %1078 = vmatprep.mubr.f32.mxu0 0.0
      %1079 = vmatmul.mubr.f32.gmra.mxu0 %v914
      %v1080 = vpop.f32.mrf.mxu0
      %v1081 = vadd.f32 %v963, %v1080
      %v1082 = vpop.f32.mrf.mxu0
      %1083 = vmatprep.mubr.f32.mxu0 0.0
      %1084 = vmatmul.mubr.f32.gmra.mxu0 %v915
      %v1085 = vpop.f32.mrf.mxu0
      %v1086 = vadd.f32 %v963, %v1085
      %v1087 = vpop.f32.mrf.mxu0
      %1088 = vmatprep.mubr.f32.mxu0 0.0
      %1089 = vmatmul.mubr.f32.gmra.mxu0 %v916
      %v1090 = vpop.f32.mrf.mxu0
      %v1091 = vadd.f32 %v963, %v1090
      %v1092 = vpop.f32.mrf.mxu0
      %1093 = vmatprep.mubr.f32.mxu0 0.0
      %1094 = vmatmul.mubr.f32.gmra.mxu0 %v917
      %v1095 = vpop.f32.mrf.mxu0
      %v1096 = vadd.f32 %v963, %v1095
      %v1097 = vpop.f32.mrf.mxu0
      %1098 = vmatprep.mubr.f32.mxu0 0.0
      %1099 = vmatmul.mubr.f32.gmra.mxu0 %v918
      %v1100 = vpop.f32.mrf.mxu0
      %v1101 = vadd.f32 %v963, %v1100
      %v1102 = vpop.f32.mrf.mxu0
      %1103 = vmatprep.mubr.f32.mxu0 0.0
      %1104 = vmatmul.mubr.f32.gmra.mxu0 %v919
      %v1105 = vpop.f32.mrf.mxu0
      %v1106 = vadd.f32 %v963, %v1105
      %v1107 = vpop.f32.mrf.mxu0
      %1108 = vmatprep.mubr.f32.mxu0 0.0
      %1109 = vmatmul.mubr.f32.gmra.mxu0 %v920
      %v1110 = vpop.f32.mrf.mxu0
      %v1111 = vadd.f32 %v963, %v1110
      %v1112 = vpop.f32.mrf.mxu0
      %1113 = vmatprep.mubr.f32.mxu0 0.0
      %1114 = vmatmul.mubr.f32.gmra.mxu0 %v921
      %v1115 = vpop.f32.mrf.mxu0
      %v1116 = vadd.f32 %v963, %v1115
      %v1117 = vpop.f32.mrf.mxu0
      %1118 = vmatprep.mubr.f32.mxu0 0.0
      %1119 = vmatmul.mubr.f32.gmra.mxu0 %v922
      %v1120 = vpop.f32.mrf.mxu0
      %v1121 = vadd.f32 %v963, %v1120
      %v1122 = vpop.f32.mrf.mxu0
      %1123 = vmatprep.mubr.f32.mxu0 0.0
      %1124 = vmatmul.mubr.f32.gmra.mxu0 %v923
      %v1125 = vpop.f32.mrf.mxu0
      %v1126 = vadd.f32 %v963, %v1125
      %v1127 = vpop.f32.mrf.mxu0
      %1128 = vmatprep.mubr.f32.mxu0 0.0
      %1129 = vmatmul.mubr.f32.gmra.mxu0 %v924
      %v1130 = vpop.f32.mrf.mxu0
      %v1131 = vadd.f32 %v963, %v1130
      %v1132 = vpop.f32.mrf.mxu0
      %1133 = vmatprep.mubr.f32.mxu0 0.0
      %1134 = vmatmul.mubr.f32.gmra.mxu0 %v925
      %v1135 = vpop.f32.mrf.mxu0
      %v1136 = vadd.f32 %v963, %v1135
      %v1137 = vpop.f32.mrf.mxu0
      %1138 = vmatprep.mubr.f32.mxu0 0.0
      %1139 = vmatmul.mubr.f32.gmra.mxu0 %v926
      %v1140 = vpop.f32.mrf.mxu0
      %v1141 = vadd.f32 %v963, %v1140
      %v1142 = vpop.f32.mrf.mxu0
      %1143 = vmatprep.mubr.f32.mxu0 0.0
      %1144 = vmatmul.mubr.f32.gmra.mxu0 %v927
      %v1145 = vpop.f32.mrf.mxu0
      %v1146 = vadd.f32 %v963, %v1145
      %v1147 = vpop.f32.mrf.mxu0
      %1148 = vmatprep.mubr.f32.mxu0 0.0
      %1149 = vmatmul.mubr.f32.gmra.mxu0 %v928
      %v1150 = vpop.f32.mrf.mxu0
      %v1151 = vadd.f32 %v963, %v1150
      %v1152 = vpop.f32.mrf.mxu0
      %1153 = vmatprep.mubr.f32.mxu0 0.0
      %1154 = vmatmul.mubr.f32.gmra.mxu0 %v929
      %v1155 = vpop.f32.mrf.mxu0
      %v1156 = vadd.f32 %v963, %v1155
      %v1157 = vpop.f32.mrf.mxu0
      %1158 = vmatprep.mubr.f32.mxu0 0.0
      %1159 = vmatmul.mubr.f32.gmra.mxu0 %v930
      %v1160 = vpop.f32.mrf.mxu0
      %v1161 = vadd.f32 %v963, %v1160
      %v1162 = vpop.f32.mrf.mxu0
      %1163 = vmatprep.mubr.f32.mxu0 0.0
      %1164 = vmatmul.mubr.f32.gmra.mxu0 %v931
      %v1165 = vpop.f32.mrf.mxu0
      %v1166 = vadd.f32 %v963, %v1165
      %v1167 = vpop.f32.mrf.mxu0
      %1168 = vmatprep.mubr.f32.mxu0 0.0
      %1169 = vmatmul.mubr.f32.gmra.mxu0 %v932
      %v1170 = vpop.f32.mrf.mxu0
      %v1171 = vadd.f32 %v963, %v1170
      %v1172 = vpop.f32.mrf.mxu0
      %1173 = vmatprep.mubr.f32.mxu0 0.0
      %1174 = vmatmul.mubr.f32.gmra.mxu0 %v933
      %v1175 = vpop.f32.mrf.mxu0
      %v1176 = vadd.f32 %v963, %v1175
      %v1177 = vpop.f32.mrf.mxu0
      %1178 = vmatprep.mubr.f32.mxu0 0.0
      %1179 = vmatmul.mubr.f32.gmra.mxu0 %v934
      %v1180 = vpop.f32.mrf.mxu0
      %v1181 = vadd.f32 %v963, %v1180
      %v1182 = vpop.f32.mrf.mxu0
      %1183 = vmatprep.mubr.f32.mxu0 0.0
      %1184 = vmatmul.mubr.f32.gmra.mxu0 %v935
      %v1185 = vpop.f32.mrf.mxu0
      %v1186 = vadd.f32 %v963, %v1185
      %v1187 = vpop.f32.mrf.mxu0
      %1188 = vmatprep.mubr.f32.mxu0 0.0
      %1189 = vmatmul.mubr.f32.gmra.mxu0 %v936
      %v1190 = vpop.f32.mrf.mxu0
      %v1191 = vadd.f32 %v963, %v1190
      %v1192 = vpop.f32.mrf.mxu0
      %1193 = vmatprep.mubr.f32.mxu0 0.0
      %1194 = vmatmul.mubr.f32.gmra.mxu0 %v937
      %v1195 = vpop.f32.mrf.mxu0
      %v1196 = vadd.f32 %v963, %v1195
      %v1197 = vpop.f32.mrf.mxu0
      %1198 = vmatprep.mubr.f32.mxu0 0.0
      %1199 = vmatmul.mubr.f32.gmra.mxu0 %v938
      %v1200 = vpop.f32.mrf.mxu0
      %v1201 = vadd.f32 %v963, %v1200
      %v1202 = vpop.f32.mrf.mxu0
      %1203 = vmatprep.mubr.f32.mxu0 0.0
      %1204 = vmatmul.mubr.f32.gmra.mxu0 %v939
      %v1205 = vpop.f32.mrf.mxu0
      %v1206 = vadd.f32 %v963, %v1205
      %v1207 = vpop.f32.mrf.mxu0
      %1208 = vmatprep.mubr.f32.mxu0 0.0
      %1209 = vmatmul.mubr.f32.gmra.mxu0 %v940
      %v1210 = vpop.f32.mrf.mxu0
      %v1211 = vadd.f32 %v963, %v1210
      %v1212 = vpop.f32.mrf.mxu0
      %1213 = vmatprep.mubr.f32.mxu0 0.0
      %1214 = vmatmul.mubr.f32.gmra.mxu0 %v941
      %v1215 = vpop.f32.mrf.mxu0
      %v1216 = vadd.f32 %v963, %v1215
      %v1217 = vpop.f32.mrf.mxu0
      %1218 = vdwg.mxu0
      %v1219 = vmax.f32 %v1031, 0.0
      %v1220 = vmax.f32 %v1036, 0.0
      %v1221 = vmax.f32 %v1041, 0.0
      %v1222 = vmax.f32 %v1046, 0.0
      %v1223 = vmax.f32 %v1051, 0.0
      %v1224 = vmax.f32 %v1056, 0.0
      %v1225 = vmax.f32 %v1061, 0.0
      %v1226 = vmax.f32 %v1066, 0.0
      %v1227 = vmax.f32 %v1071, 0.0
      %v1228 = vmax.f32 %v1076, 0.0
      %v1229 = vmax.f32 %v1081, 0.0
      %v1230 = vmax.f32 %v1086, 0.0
      %v1231 = vmax.f32 %v1091, 0.0
      %v1232 = vmax.f32 %v1096, 0.0
      %v1233 = vmax.f32 %v1101, 0.0
      %v1234 = vmax.f32 %v1106, 0.0
      %v1235 = vmax.f32 %v1111, 0.0
      %v1236 = vmax.f32 %v1116, 0.0
      %v1237 = vmax.f32 %v1121, 0.0
      %v1238 = vmax.f32 %v1126, 0.0
      %v1239 = vmax.f32 %v1131, 0.0
      %v1240 = vmax.f32 %v1136, 0.0
      %v1241 = vmax.f32 %v1141, 0.0
      %v1242 = vmax.f32 %v1146, 0.0
      %v1243 = vmax.f32 %v1151, 0.0
      %v1244 = vmax.f32 %v1156, 0.0
      %v1245 = vmax.f32 %v1161, 0.0
      %v1246 = vmax.f32 %v1166, 0.0
      %v1247 = vmax.f32 %v1171, 0.0
      %v1248 = vmax.f32 %v1176, 0.0
      %v1249 = vmax.f32 %v1181, 0.0
      %v1250 = vmax.f32 %v1186, 0.0
      %v1251 = vmax.f32 %v1191, 0.0
      %v1252 = vmax.f32 %v1196, 0.0
      %v1253 = vmax.f32 %v1201, 0.0
      %v1254 = vmax.f32 %v1206, 0.0
      %v1255 = vmax.f32 %v1211, 0.0
      %v1256 = vmax.f32 %v1216, 0.0
      %s1257 = scalar_lea.vmem %s1, 384
      %v1258 = vld [vmem:[%s1257] sm:$0xff]
      %v1259 = vld [vmem:[%s1257 + $0x8] sm:$0xff]
      %v1260 = vld [vmem:[%s1257 + $0x10] sm:$0xff]
      %v1261 = vld [vmem:[%s1257 + $0x18] sm:$0xff]
      %v1262 = vld [vmem:[%s1257 + $0x20] sm:$0xff]
      %v1263 = vld [vmem:[%s1257 + $0x28] sm:$0xff]
      %v1264 = vld [vmem:[%s1257 + $0x30] sm:$0xff]
      %v1265 = vld [vmem:[%s1257 + $0x38] sm:$0xff]
      %v1266 = vld [vmem:[%s2 + $0x3] sm:$0x1]
      %v1267 = vlaneseq
      %v1268 = vshrl.u32 %v1267, 7
      %v1269 = vsub.s32 0, %v1268
      %v1270 = vrot.slane %v1266, %v1269
      %vm1271 = vcmask 523264
      %v1273 = vsel %vm1271, %v1219, 0
      %v1276 = vsel %vm1271, %v1220, 0
      %v1279 = vsel %vm1271, %v1221, 0
      %v1282 = vsel %vm1271, %v1222, 0
      %v1285 = vsel %vm1271, %v1223, 0
      %v1288 = vsel %vm1271, %v1224, 0
      %v1291 = vsel %vm1271, %v1225, 0
      %v1294 = vsel %vm1271, %v1226, 0
      %v1297 = vsel %vm1271, %v1227, 0
      %v1300 = vsel %vm1271, %v1228, 0
      %v1303 = vsel %vm1271, %v1229, 0
      %v1306 = vsel %vm1271, %v1230, 0
      %v1309 = vsel %vm1271, %v1231, 0
      %v1312 = vsel %vm1271, %v1232, 0
      %v1315 = vsel %vm1271, %v1233, 0
      %v1318 = vsel %vm1271, %v1234, 0
      %v1321 = vsel %vm1271, %v1235, 0
      %v1324 = vsel %vm1271, %v1236, 0
      %v1327 = vsel %vm1271, %v1237, 0
      %v1330 = vsel %vm1271, %v1238, 0
      %v1333 = vsel %vm1271, %v1239, 0
      %v1336 = vsel %vm1271, %v1240, 0
      %v1339 = vsel %vm1271, %v1241, 0
      %v1342 = vsel %vm1271, %v1242, 0
      %v1345 = vsel %vm1271, %v1243, 0
      %v1348 = vsel %vm1271, %v1244, 0
      %v1351 = vsel %vm1271, %v1245, 0
      %v1354 = vsel %vm1271, %v1246, 0
      %v1357 = vsel %vm1271, %v1247, 0
      %v1360 = vsel %vm1271, %v1248, 0
      %v1363 = vsel %vm1271, %v1249, 0
      %v1366 = vsel %vm1271, %v1250, 0
      %v1369 = vsel %vm1271, %v1251, 0
      %v1372 = vsel %vm1271, %v1252, 0
      %v1375 = vsel %vm1271, %v1253, 0
      %v1378 = vsel %vm1271, %v1254, 0
      %v1381 = vsel %vm1271, %v1255, 0
      %v1384 = vsel %vm1271, %v1256, 0
      %1386 = vmatprep.subr.mxu0 0.0
      %1387 = vmatpush1.msra.mxu0 0.0
      %1388 = vmatprep.subr.mxu0 0.0
      %1389 = vmatpush1.msra.mxu0 0.0
      %1390 = vmatprep.subr.mxu0 0.0
      %1391 = vmatpush1.msra.mxu0 0.0
      %1392 = vmatprep.subr.mxu0 0.0
      %1393 = vmatpush1.msra.mxu0 0.0
      %1394 = vmatprep.subr.mxu0 0.0
      %1395 = vmatpush1.msra.mxu0 0.0
      %1396 = vmatprep.subr.mxu0 0.0
      %1397 = vmatpush1.msra.mxu0 0.0
      %1398 = vmatprep.subr.mxu0 0.0
      %1399 = vmatpush1.msra.mxu0 0.0
      %1400 = vmatprep.subr.mxu0 0.0
      %1401 = vmatpush1.msra.mxu0 0.0
      %1402 = vmatprep.subr.mxu0 0.0
      %1403 = vmatpush1.msra.mxu0 %v1265
      %1404 = vmatprep.subr.mxu0 0.0
      %1405 = vmatpush1.msra.mxu0 %v1264
      %1406 = vmatprep.subr.mxu0 0.0
      %1407 = vmatpush1.msra.mxu0 %v1263
      %1408 = vmatprep.subr.mxu0 0.0
      %1409 = vmatpush1.msra.mxu0 %v1262
      %1410 = vmatprep.subr.mxu0 0.0
      %1411 = vmatpush1.msra.mxu0 %v1261
      %1412 = vmatprep.subr.mxu0 0.0
      %1413 = vmatpush1.msra.mxu0 %v1260
      %1414 = vmatprep.subr.mxu0 0.0
      %1415 = vmatpush1.msra.mxu0 %v1259
      %1416 = vmatprep.subr.mxu0 0.0
      %1417 = vmatpush1.msra.mxu0 %v1258
      %1418 = vmatprep.subr.mxu0 0.0
      %1419 = vmatpush2.msra.mxu0 0.0
      %1420 = vmatprep.subr.mxu0 0.0
      %1421 = vmatpush2.msra.mxu0 0.0
      %1422 = vmatprep.subr.mxu0 0.0
      %1423 = vmatpush2.msra.mxu0 0.0
      %1424 = vmatprep.subr.mxu0 0.0
      %1425 = vmatpush2.msra.mxu0 0.0
      %1426 = vmatprep.subr.mxu0 0.0
      %1427 = vmatpush2.msra.mxu0 0.0
      %1428 = vmatprep.subr.mxu0 0.0
      %1429 = vmatpush2.msra.mxu0 0.0
      %1430 = vmatprep.subr.mxu0 0.0
      %1431 = vmatpush2.msra.mxu0 0.0
      %1432 = vmatprep.subr.mxu0 0.0
      %1433 = vmatpush2.msra.mxu0 0.0
      %1434 = vmatprep.subr.mxu0 0.0
      %1435 = vmatpush2.msra.mxu0 0.0
      %1436 = vmatprep.subr.mxu0 0.0
      %1437 = vmatpush2.msra.mxu0 0.0
      %1438 = vmatprep.subr.mxu0 0.0
      %1439 = vmatpush2.msra.mxu0 0.0
      %1440 = vmatprep.subr.mxu0 0.0
      %1441 = vmatpush2.msra.mxu0 0.0
      %1442 = vmatprep.subr.mxu0 0.0
      %1443 = vmatpush2.msra.mxu0 0.0
      %1444 = vmatprep.subr.mxu0 0.0
      %1445 = vmatpush2.msra.mxu0 0.0
      %1446 = vmatprep.subr.mxu0 0.0
      %1447 = vmatpush2.msra.mxu0 0.0
      %1448 = vmatprep.subr.mxu0 0.0
      %1449 = vmatpush2.msra.mxu0 0.0
      %1450 = vmatprep.mubr.f32.mxu0 0.0
      %1451 = vmatmul.mubr.f32.gmra.mxu0 %v1273
      %v1452 = vpop.f32.mrf.mxu0
      %v1453 = vadd.f32 %v1270, %v1452
      %v1454 = vpop.f32.mrf.mxu0
      %1455 = vmatprep.mubr.f32.mxu0 0.0
      %1456 = vmatmul.mubr.f32.gmra.mxu0 %v1276
      %v1457 = vpop.f32.mrf.mxu0
      %v1458 = vadd.f32 %v1270, %v1457
      %v1459 = vpop.f32.mrf.mxu0
      %1460 = vmatprep.mubr.f32.mxu0 0.0
      %1461 = vmatmul.mubr.f32.gmra.mxu0 %v1279
      %v1462 = vpop.f32.mrf.mxu0
      %v1463 = vadd.f32 %v1270, %v1462
      %v1464 = vpop.f32.mrf.mxu0
      %1465 = vmatprep.mubr.f32.mxu0 0.0
      %1466 = vmatmul.mubr.f32.gmra.mxu0 %v1282
      %v1467 = vpop.f32.mrf.mxu0
      %v1468 = vadd.f32 %v1270, %v1467
      %v1469 = vpop.f32.mrf.mxu0
      %1470 = vmatprep.mubr.f32.mxu0 0.0
      %1471 = vmatmul.mubr.f32.gmra.mxu0 %v1285
      %v1472 = vpop.f32.mrf.mxu0
      %v1473 = vadd.f32 %v1270, %v1472
      %v1474 = vpop.f32.mrf.mxu0
      %1475 = vmatprep.mubr.f32.mxu0 0.0
      %1476 = vmatmul.mubr.f32.gmra.mxu0 %v1288
      %v1477 = vpop.f32.mrf.mxu0
      %v1478 = vadd.f32 %v1270, %v1477
      %v1479 = vpop.f32.mrf.mxu0
      %1480 = vmatprep.mubr.f32.mxu0 0.0
      %1481 = vmatmul.mubr.f32.gmra.mxu0 %v1291
      %v1482 = vpop.f32.mrf.mxu0
      %v1483 = vadd.f32 %v1270, %v1482
      %v1484 = vpop.f32.mrf.mxu0
      %1485 = vmatprep.mubr.f32.mxu0 0.0
      %1486 = vmatmul.mubr.f32.gmra.mxu0 %v1294
      %v1487 = vpop.f32.mrf.mxu0
      %v1488 = vadd.f32 %v1270, %v1487
      %v1489 = vpop.f32.mrf.mxu0
      %1490 = vmatprep.mubr.f32.mxu0 0.0
      %1491 = vmatmul.mubr.f32.gmra.mxu0 %v1297
      %v1492 = vpop.f32.mrf.mxu0
      %v1493 = vadd.f32 %v1270, %v1492
      %v1494 = vpop.f32.mrf.mxu0
      %1495 = vmatprep.mubr.f32.mxu0 0.0
      %1496 = vmatmul.mubr.f32.gmra.mxu0 %v1300
      %v1497 = vpop.f32.mrf.mxu0
      %v1498 = vadd.f32 %v1270, %v1497
      %v1499 = vpop.f32.mrf.mxu0
      %1500 = vmatprep.mubr.f32.mxu0 0.0
      %1501 = vmatmul.mubr.f32.gmra.mxu0 %v1303
      %v1502 = vpop.f32.mrf.mxu0
      %v1503 = vadd.f32 %v1270, %v1502
      %v1504 = vpop.f32.mrf.mxu0
      %1505 = vmatprep.mubr.f32.mxu0 0.0
      %1506 = vmatmul.mubr.f32.gmra.mxu0 %v1306
      %v1507 = vpop.f32.mrf.mxu0
      %v1508 = vadd.f32 %v1270, %v1507
      %v1509 = vpop.f32.mrf.mxu0
      %1510 = vmatprep.mubr.f32.mxu0 0.0
      %1511 = vmatmul.mubr.f32.gmra.mxu0 %v1309
      %v1512 = vpop.f32.mrf.mxu0
      %v1513 = vadd.f32 %v1270, %v1512
      %v1514 = vpop.f32.mrf.mxu0
      %1515 = vmatprep.mubr.f32.mxu0 0.0
      %1516 = vmatmul.mubr.f32.gmra.mxu0 %v1312
      %v1517 = vpop.f32.mrf.mxu0
      %v1518 = vadd.f32 %v1270, %v1517
      %v1519 = vpop.f32.mrf.mxu0
      %1520 = vmatprep.mubr.f32.mxu0 0.0
      %1521 = vmatmul.mubr.f32.gmra.mxu0 %v1315
      %v1522 = vpop.f32.mrf.mxu0
      %v1523 = vadd.f32 %v1270, %v1522
      %v1524 = vpop.f32.mrf.mxu0
      %1525 = vmatprep.mubr.f32.mxu0 0.0
      %1526 = vmatmul.mubr.f32.gmra.mxu0 %v1318
      %v1527 = vpop.f32.mrf.mxu0
      %v1528 = vadd.f32 %v1270, %v1527
      %v1529 = vpop.f32.mrf.mxu0
      %1530 = vmatprep.mubr.f32.mxu0 0.0
      %1531 = vmatmul.mubr.f32.gmra.mxu0 %v1321
      %v1532 = vpop.f32.mrf.mxu0
      %v1533 = vadd.f32 %v1270, %v1532
      %v1534 = vpop.f32.mrf.mxu0
      %1535 = vmatprep.mubr.f32.mxu0 0.0
      %1536 = vmatmul.mubr.f32.gmra.mxu0 %v1324
      %v1537 = vpop.f32.mrf.mxu0
      %v1538 = vadd.f32 %v1270, %v1537
      %v1539 = vpop.f32.mrf.mxu0
      %1540 = vmatprep.mubr.f32.mxu0 0.0
      %1541 = vmatmul.mubr.f32.gmra.mxu0 %v1327
      %v1542 = vpop.f32.mrf.mxu0
      %v1543 = vadd.f32 %v1270, %v1542
      %v1544 = vpop.f32.mrf.mxu0
      %1545 = vmatprep.mubr.f32.mxu0 0.0
      %1546 = vmatmul.mubr.f32.gmra.mxu0 %v1330
      %v1547 = vpop.f32.mrf.mxu0
      %v1548 = vadd.f32 %v1270, %v1547
      %v1549 = vpop.f32.mrf.mxu0
      %1550 = vmatprep.mubr.f32.mxu0 0.0
      %1551 = vmatmul.mubr.f32.gmra.mxu0 %v1333
      %v1552 = vpop.f32.mrf.mxu0
      %v1553 = vadd.f32 %v1270, %v1552
      %v1554 = vpop.f32.mrf.mxu0
      %1555 = vmatprep.mubr.f32.mxu0 0.0
      %1556 = vmatmul.mubr.f32.gmra.mxu0 %v1336
      %v1557 = vpop.f32.mrf.mxu0
      %v1558 = vadd.f32 %v1270, %v1557
      %v1559 = vpop.f32.mrf.mxu0
      %1560 = vmatprep.mubr.f32.mxu0 0.0
      %1561 = vmatmul.mubr.f32.gmra.mxu0 %v1339
      %v1562 = vpop.f32.mrf.mxu0
      %v1563 = vadd.f32 %v1270, %v1562
      %v1564 = vpop.f32.mrf.mxu0
      %1565 = vmatprep.mubr.f32.mxu0 0.0
      %1566 = vmatmul.mubr.f32.gmra.mxu0 %v1342
      %v1567 = vpop.f32.mrf.mxu0
      %v1568 = vadd.f32 %v1270, %v1567
      %v1569 = vpop.f32.mrf.mxu0
      %1570 = vmatprep.mubr.f32.mxu0 0.0
      %1571 = vmatmul.mubr.f32.gmra.mxu0 %v1345
      %v1572 = vpop.f32.mrf.mxu0
      %v1573 = vadd.f32 %v1270, %v1572
      %v1574 = vpop.f32.mrf.mxu0
      %1575 = vmatprep.mubr.f32.mxu0 0.0
      %1576 = vmatmul.mubr.f32.gmra.mxu0 %v1348
      %v1577 = vpop.f32.mrf.mxu0
      %v1578 = vadd.f32 %v1270, %v1577
      %v1579 = vpop.f32.mrf.mxu0
      %1580 = vmatprep.mubr.f32.mxu0 0.0
      %1581 = vmatmul.mubr.f32.gmra.mxu0 %v1351
      %v1582 = vpop.f32.mrf.mxu0
      %v1583 = vadd.f32 %v1270, %v1582
      %v1584 = vpop.f32.mrf.mxu0
      %1585 = vmatprep.mubr.f32.mxu0 0.0
      %1586 = vmatmul.mubr.f32.gmra.mxu0 %v1354
      %v1587 = vpop.f32.mrf.mxu0
      %v1588 = vadd.f32 %v1270, %v1587
      %v1589 = vpop.f32.mrf.mxu0
      %1590 = vmatprep.mubr.f32.mxu0 0.0
      %1591 = vmatmul.mubr.f32.gmra.mxu0 %v1357
      %v1592 = vpop.f32.mrf.mxu0
      %v1593 = vadd.f32 %v1270, %v1592
      %v1594 = vpop.f32.mrf.mxu0
      %1595 = vmatprep.mubr.f32.mxu0 0.0
      %1596 = vmatmul.mubr.f32.gmra.mxu0 %v1360
      %v1597 = vpop.f32.mrf.mxu0
      %v1598 = vadd.f32 %v1270, %v1597
      %v1599 = vpop.f32.mrf.mxu0
      %1600 = vmatprep.mubr.f32.mxu0 0.0
      %1601 = vmatmul.mubr.f32.gmra.mxu0 %v1363
      %v1602 = vpop.f32.mrf.mxu0
      %v1603 = vadd.f32 %v1270, %v1602
      %v1604 = vpop.f32.mrf.mxu0
      %1605 = vmatprep.mubr.f32.mxu0 0.0
      %1606 = vmatmul.mubr.f32.gmra.mxu0 %v1366
      %v1607 = vpop.f32.mrf.mxu0
      %v1608 = vadd.f32 %v1270, %v1607
      %v1609 = vpop.f32.mrf.mxu0
      %1610 = vmatprep.mubr.f32.mxu0 0.0
      %1611 = vmatmul.mubr.f32.gmra.mxu0 %v1369
      %v1612 = vpop.f32.mrf.mxu0
      %v1613 = vadd.f32 %v1270, %v1612
      %v1614 = vpop.f32.mrf.mxu0
      %1615 = vmatprep.mubr.f32.mxu0 0.0
      %1616 = vmatmul.mubr.f32.gmra.mxu0 %v1372
      %v1617 = vpop.f32.mrf.mxu0
      %v1618 = vadd.f32 %v1270, %v1617
      %v1619 = vpop.f32.mrf.mxu0
      %1620 = vmatprep.mubr.f32.mxu0 0.0
      %1621 = vmatmul.mubr.f32.gmra.mxu0 %v1375
      %v1622 = vpop.f32.mrf.mxu0
      %v1623 = vadd.f32 %v1270, %v1622
      %v1624 = vpop.f32.mrf.mxu0
      %1625 = vmatprep.mubr.f32.mxu0 0.0
      %1626 = vmatmul.mubr.f32.gmra.mxu0 %v1378
      %v1627 = vpop.f32.mrf.mxu0
      %v1628 = vadd.f32 %v1270, %v1627
      %v1629 = vpop.f32.mrf.mxu0
      %1630 = vmatprep.mubr.f32.mxu0 0.0
      %1631 = vmatmul.mubr.f32.gmra.mxu0 %v1381
      %v1632 = vpop.f32.mrf.mxu0
      %v1633 = vadd.f32 %v1270, %v1632
      %v1634 = vpop.f32.mrf.mxu0
      %1635 = vmatprep.mubr.f32.mxu0 0.0
      %1636 = vmatmul.mubr.f32.gmra.mxu0 %v1384
      %v1637 = vpop.f32.mrf.mxu0
      %v1638 = vadd.f32 %v1270, %v1637
      %v1639 = vpop.f32.mrf.mxu0
      %1640 = vdwg.mxu0
      %v1641 = vmax.f32 %v1453, 0.0
      %v1642 = vmax.f32 %v1458, 0.0
      %v1643 = vmax.f32 %v1463, 0.0
      %v1644 = vmax.f32 %v1468, 0.0
      %v1645 = vmax.f32 %v1473, 0.0
      %v1646 = vmax.f32 %v1478, 0.0
      %v1647 = vmax.f32 %v1483, 0.0
      %v1648 = vmax.f32 %v1488, 0.0
      %v1649 = vmax.f32 %v1493, 0.0
      %v1650 = vmax.f32 %v1498, 0.0
      %v1651 = vmax.f32 %v1503, 0.0
      %v1652 = vmax.f32 %v1508, 0.0
      %v1653 = vmax.f32 %v1513, 0.0
      %v1654 = vmax.f32 %v1518, 0.0
      %v1655 = vmax.f32 %v1523, 0.0
      %v1656 = vmax.f32 %v1528, 0.0
      %v1657 = vmax.f32 %v1533, 0.0
      %v1658 = vmax.f32 %v1538, 0.0
      %v1659 = vmax.f32 %v1543, 0.0
      %v1660 = vmax.f32 %v1548, 0.0
      %v1661 = vmax.f32 %v1553, 0.0
      %v1662 = vmax.f32 %v1558, 0.0
      %v1663 = vmax.f32 %v1563, 0.0
      %v1664 = vmax.f32 %v1568, 0.0
      %v1665 = vmax.f32 %v1573, 0.0
      %v1666 = vmax.f32 %v1578, 0.0
      %v1667 = vmax.f32 %v1583, 0.0
      %v1668 = vmax.f32 %v1588, 0.0
      %v1669 = vmax.f32 %v1593, 0.0
      %v1670 = vmax.f32 %v1598, 0.0
      %v1671 = vmax.f32 %v1603, 0.0
      %v1672 = vmax.f32 %v1608, 0.0
      %v1673 = vmax.f32 %v1613, 0.0
      %v1674 = vmax.f32 %v1618, 0.0
      %v1675 = vmax.f32 %v1623, 0.0
      %v1676 = vmax.f32 %v1628, 0.0
      %v1677 = vmax.f32 %v1633, 0.0
      %v1678 = vmax.f32 %v1638, 0.0
      %s1679 = scalar_lea.vmem %s1, 512
      %v1680 = vld [vmem:[%s1679] sm:$0xff]
      %v1681 = vld [vmem:[%s1679 + $0x8] sm:$0xff]
      %v1682 = vld [vmem:[%s1679 + $0x10] sm:$0xff]
      %v1683 = vld [vmem:[%s1679 + $0x18] sm:$0xff]
      %v1684 = vld [vmem:[%s2 + $0x4] sm:$0x1]
      %v1685 = vlaneseq
      %v1686 = vshrl.u32 %v1685, 7
      %v1687 = vsub.s32 0, %v1686
      %v1688 = vrot.slane %v1684, %v1687
      %vm1689 = vcmask 261120
      %v1691 = vsel %vm1689, %v1641, 0
      %v1694 = vsel %vm1689, %v1642, 0
      %v1697 = vsel %vm1689, %v1643, 0
      %v1700 = vsel %vm1689, %v1644, 0
      %v1703 = vsel %vm1689, %v1645, 0
      %v1706 = vsel %vm1689, %v1646, 0
      %v1709 = vsel %vm1689, %v1647, 0
      %v1712 = vsel %vm1689, %v1648, 0
      %v1715 = vsel %vm1689, %v1649, 0
      %v1718 = vsel %vm1689, %v1650, 0
      %v1721 = vsel %vm1689, %v1651, 0
      %v1724 = vsel %vm1689, %v1652, 0
      %v1727 = vsel %vm1689, %v1653, 0
      %v1730 = vsel %vm1689, %v1654, 0
      %v1733 = vsel %vm1689, %v1655, 0
      %v1736 = vsel %vm1689, %v1656, 0
      %v1739 = vsel %vm1689, %v1657, 0
      %v1742 = vsel %vm1689, %v1658, 0
      %v1745 = vsel %vm1689, %v1659, 0
      %v1748 = vsel %vm1689, %v1660, 0
      %v1751 = vsel %vm1689, %v1661, 0
      %v1754 = vsel %vm1689, %v1662, 0
      %v1757 = vsel %vm1689, %v1663, 0
      %v1760 = vsel %vm1689, %v1664, 0
      %v1763 = vsel %vm1689, %v1665, 0
      %v1766 = vsel %vm1689, %v1666, 0
      %v1769 = vsel %vm1689, %v1667, 0
      %v1772 = vsel %vm1689, %v1668, 0
      %v1775 = vsel %vm1689, %v1669, 0
      %v1778 = vsel %vm1689, %v1670, 0
      %v1781 = vsel %vm1689, %v1671, 0
      %v1784 = vsel %vm1689, %v1672, 0
      %v1787 = vsel %vm1689, %v1673, 0
      %v1790 = vsel %vm1689, %v1674, 0
      %v1793 = vsel %vm1689, %v1675, 0
      %v1796 = vsel %vm1689, %v1676, 0
      %v1799 = vsel %vm1689, %v1677, 0
      %v1802 = vsel %vm1689, %v1678, 0
      %1804 = vmatprep.subr.mxu0 0.0
      %1805 = vmatpush1.msra.mxu0 0.0
      %1806 = vmatprep.subr.mxu0 0.0
      %1807 = vmatpush1.msra.mxu0 0.0
      %1808 = vmatprep.subr.mxu0 0.0
      %1809 = vmatpush1.msra.mxu0 0.0
      %1810 = vmatprep.subr.mxu0 0.0
      %1811 = vmatpush1.msra.mxu0 0.0
      %1812 = vmatprep.subr.mxu0 0.0
      %1813 = vmatpush1.msra.mxu0 0.0
      %1814 = vmatprep.subr.mxu0 0.0
      %1815 = vmatpush1.msra.mxu0 0.0
      %1816 = vmatprep.subr.mxu0 0.0
      %1817 = vmatpush1.msra.mxu0 0.0
      %1818 = vmatprep.subr.mxu0 0.0
      %1819 = vmatpush1.msra.mxu0 0.0
      %1820 = vmatprep.subr.mxu0 0.0
      %1821 = vmatpush1.msra.mxu0 0.0
      %1822 = vmatprep.subr.mxu0 0.0
      %1823 = vmatpush1.msra.mxu0 0.0
      %1824 = vmatprep.subr.mxu0 0.0
      %1825 = vmatpush1.msra.mxu0 0.0
      %1826 = vmatprep.subr.mxu0 0.0
      %1827 = vmatpush1.msra.mxu0 0.0
      %1828 = vmatprep.subr.mxu0 0.0
      %1829 = vmatpush1.msra.mxu0 %v1683
      %1830 = vmatprep.subr.mxu0 0.0
      %1831 = vmatpush1.msra.mxu0 %v1682
      %1832 = vmatprep.subr.mxu0 0.0
      %1833 = vmatpush1.msra.mxu0 %v1681
      %1834 = vmatprep.subr.mxu0 0.0
      %1835 = vmatpush1.msra.mxu0 %v1680
      %1836 = vmatprep.subr.mxu0 0.0
      %1837 = vmatpush2.msra.mxu0 0.0
      %1838 = vmatprep.subr.mxu0 0.0
      %1839 = vmatpush2.msra.mxu0 0.0
      %1840 = vmatprep.subr.mxu0 0.0
      %1841 = vmatpush2.msra.mxu0 0.0
      %1842 = vmatprep.subr.mxu0 0.0
      %1843 = vmatpush2.msra.mxu0 0.0
      %1844 = vmatprep.subr.mxu0 0.0
      %1845 = vmatpush2.msra.mxu0 0.0
      %1846 = vmatprep.subr.mxu0 0.0
      %1847 = vmatpush2.msra.mxu0 0.0
      %1848 = vmatprep.subr.mxu0 0.0
      %1849 = vmatpush2.msra.mxu0 0.0
      %1850 = vmatprep.subr.mxu0 0.0
      %1851 = vmatpush2.msra.mxu0 0.0
      %1852 = vmatprep.subr.mxu0 0.0
      %1853 = vmatpush2.msra.mxu0 0.0
      %1854 = vmatprep.subr.mxu0 0.0
      %1855 = vmatpush2.msra.mxu0 0.0
      %1856 = vmatprep.subr.mxu0 0.0
      %1857 = vmatpush2.msra.mxu0 0.0
      %1858 = vmatprep.subr.mxu0 0.0
      %1859 = vmatpush2.msra.mxu0 0.0
      %1860 = vmatprep.subr.mxu0 0.0
      %1861 = vmatpush2.msra.mxu0 0.0
      %1862 = vmatprep.subr.mxu0 0.0
      %1863 = vmatpush2.msra.mxu0 0.0
      %1864 = vmatprep.subr.mxu0 0.0
      %1865 = vmatpush2.msra.mxu0 0.0
      %1866 = vmatprep.subr.mxu0 0.0
      %1867 = vmatpush2.msra.mxu0 0.0
      %1868 = vmatprep.mubr.f32.mxu0 0.0
      %1869 = vmatmul.mubr.f32.gmra.mxu0 %v1691
      %v1870 = vpop.f32.mrf.mxu0
      %v1871 = vadd.f32 %v1688, %v1870
      %v1872 = vpop.f32.mrf.mxu0
      %1873 = vmatprep.mubr.f32.mxu0 0.0
      %1874 = vmatmul.mubr.f32.gmra.mxu0 %v1694
      %v1875 = vpop.f32.mrf.mxu0
      %v1876 = vadd.f32 %v1688, %v1875
      %v1877 = vpop.f32.mrf.mxu0
      %1878 = vmatprep.mubr.f32.mxu0 0.0
      %1879 = vmatmul.mubr.f32.gmra.mxu0 %v1697
      %v1880 = vpop.f32.mrf.mxu0
      %v1881 = vadd.f32 %v1688, %v1880
      %v1882 = vpop.f32.mrf.mxu0
      %1883 = vmatprep.mubr.f32.mxu0 0.0
      %1884 = vmatmul.mubr.f32.gmra.mxu0 %v1700
      %v1885 = vpop.f32.mrf.mxu0
      %v1886 = vadd.f32 %v1688, %v1885
      %v1887 = vpop.f32.mrf.mxu0
      %1888 = vmatprep.mubr.f32.mxu0 0.0
      %1889 = vmatmul.mubr.f32.gmra.mxu0 %v1703
      %v1890 = vpop.f32.mrf.mxu0
      %v1891 = vadd.f32 %v1688, %v1890
      %v1892 = vpop.f32.mrf.mxu0
      %1893 = vmatprep.mubr.f32.mxu0 0.0
      %1894 = vmatmul.mubr.f32.gmra.mxu0 %v1706
      %v1895 = vpop.f32.mrf.mxu0
      %v1896 = vadd.f32 %v1688, %v1895
      %v1897 = vpop.f32.mrf.mxu0
      %1898 = vmatprep.mubr.f32.mxu0 0.0
      %1899 = vmatmul.mubr.f32.gmra.mxu0 %v1709
      %v1900 = vpop.f32.mrf.mxu0
      %v1901 = vadd.f32 %v1688, %v1900
      %v1902 = vpop.f32.mrf.mxu0
      %1903 = vmatprep.mubr.f32.mxu0 0.0
      %1904 = vmatmul.mubr.f32.gmra.mxu0 %v1712
      %v1905 = vpop.f32.mrf.mxu0
      %v1906 = vadd.f32 %v1688, %v1905
      %v1907 = vpop.f32.mrf.mxu0
      %1908 = vmatprep.mubr.f32.mxu0 0.0
      %1909 = vmatmul.mubr.f32.gmra.mxu0 %v1715
      %v1910 = vpop.f32.mrf.mxu0
      %v1911 = vadd.f32 %v1688, %v1910
      %v1912 = vpop.f32.mrf.mxu0
      %1913 = vmatprep.mubr.f32.mxu0 0.0
      %1914 = vmatmul.mubr.f32.gmra.mxu0 %v1718
      %v1915 = vpop.f32.mrf.mxu0
      %v1916 = vadd.f32 %v1688, %v1915
      %v1917 = vpop.f32.mrf.mxu0
      %1918 = vmatprep.mubr.f32.mxu0 0.0
      %1919 = vmatmul.mubr.f32.gmra.mxu0 %v1721
      %v1920 = vpop.f32.mrf.mxu0
      %v1921 = vadd.f32 %v1688, %v1920
      %v1922 = vpop.f32.mrf.mxu0
      %1923 = vmatprep.mubr.f32.mxu0 0.0
      %1924 = vmatmul.mubr.f32.gmra.mxu0 %v1724
      %v1925 = vpop.f32.mrf.mxu0
      %v1926 = vadd.f32 %v1688, %v1925
      %v1927 = vpop.f32.mrf.mxu0
      %1928 = vmatprep.mubr.f32.mxu0 0.0
      %1929 = vmatmul.mubr.f32.gmra.mxu0 %v1727
      %v1930 = vpop.f32.mrf.mxu0
      %v1931 = vadd.f32 %v1688, %v1930
      %v1932 = vpop.f32.mrf.mxu0
      %1933 = vmatprep.mubr.f32.mxu0 0.0
      %1934 = vmatmul.mubr.f32.gmra.mxu0 %v1730
      %v1935 = vpop.f32.mrf.mxu0
      %v1936 = vadd.f32 %v1688, %v1935
      %v1937 = vpop.f32.mrf.mxu0
      %1938 = vmatprep.mubr.f32.mxu0 0.0
      %1939 = vmatmul.mubr.f32.gmra.mxu0 %v1733
      %v1940 = vpop.f32.mrf.mxu0
      %v1941 = vadd.f32 %v1688, %v1940
      %v1942 = vpop.f32.mrf.mxu0
      %1943 = vmatprep.mubr.f32.mxu0 0.0
      %1944 = vmatmul.mubr.f32.gmra.mxu0 %v1736
      %v1945 = vpop.f32.mrf.mxu0
      %v1946 = vadd.f32 %v1688, %v1945
      %v1947 = vpop.f32.mrf.mxu0
      %1948 = vmatprep.mubr.f32.mxu0 0.0
      %1949 = vmatmul.mubr.f32.gmra.mxu0 %v1739
      %v1950 = vpop.f32.mrf.mxu0
      %v1951 = vadd.f32 %v1688, %v1950
      %v1952 = vpop.f32.mrf.mxu0
      %1953 = vmatprep.mubr.f32.mxu0 0.0
      %1954 = vmatmul.mubr.f32.gmra.mxu0 %v1742
      %v1955 = vpop.f32.mrf.mxu0
      %v1956 = vadd.f32 %v1688, %v1955
      %v1957 = vpop.f32.mrf.mxu0
      %1958 = vmatprep.mubr.f32.mxu0 0.0
      %1959 = vmatmul.mubr.f32.gmra.mxu0 %v1745
      %v1960 = vpop.f32.mrf.mxu0
      %v1961 = vadd.f32 %v1688, %v1960
      %v1962 = vpop.f32.mrf.mxu0
      %1963 = vmatprep.mubr.f32.mxu0 0.0
      %1964 = vmatmul.mubr.f32.gmra.mxu0 %v1748
      %v1965 = vpop.f32.mrf.mxu0
      %v1966 = vadd.f32 %v1688, %v1965
      %v1967 = vpop.f32.mrf.mxu0
      %1968 = vmatprep.mubr.f32.mxu0 0.0
      %1969 = vmatmul.mubr.f32.gmra.mxu0 %v1751
      %v1970 = vpop.f32.mrf.mxu0
      %v1971 = vadd.f32 %v1688, %v1970
      %v1972 = vpop.f32.mrf.mxu0
      %1973 = vmatprep.mubr.f32.mxu0 0.0
      %1974 = vmatmul.mubr.f32.gmra.mxu0 %v1754
      %v1975 = vpop.f32.mrf.mxu0
      %v1976 = vadd.f32 %v1688, %v1975
      %v1977 = vpop.f32.mrf.mxu0
      %1978 = vmatprep.mubr.f32.mxu0 0.0
      %1979 = vmatmul.mubr.f32.gmra.mxu0 %v1757
      %v1980 = vpop.f32.mrf.mxu0
      %v1981 = vadd.f32 %v1688, %v1980
      %v1982 = vpop.f32.mrf.mxu0
      %1983 = vmatprep.mubr.f32.mxu0 0.0
      %1984 = vmatmul.mubr.f32.gmra.mxu0 %v1760
      %v1985 = vpop.f32.mrf.mxu0
      %v1986 = vadd.f32 %v1688, %v1985
      %v1987 = vpop.f32.mrf.mxu0
      %1988 = vmatprep.mubr.f32.mxu0 0.0
      %1989 = vmatmul.mubr.f32.gmra.mxu0 %v1763
      %v1990 = vpop.f32.mrf.mxu0
      %v1991 = vadd.f32 %v1688, %v1990
      %v1992 = vpop.f32.mrf.mxu0
      %1993 = vmatprep.mubr.f32.mxu0 0.0
      %1994 = vmatmul.mubr.f32.gmra.mxu0 %v1766
      %v1995 = vpop.f32.mrf.mxu0
      %v1996 = vadd.f32 %v1688, %v1995
      %v1997 = vpop.f32.mrf.mxu0
      %1998 = vmatprep.mubr.f32.mxu0 0.0
      %1999 = vmatmul.mubr.f32.gmra.mxu0 %v1769
      %v2000 = vpop.f32.mrf.mxu0
      %v2001 = vadd.f32 %v1688, %v2000
      %v2002 = vpop.f32.mrf.mxu0
      %2003 = vmatprep.mubr.f32.mxu0 0.0
      %2004 = vmatmul.mubr.f32.gmra.mxu0 %v1772
      %v2005 = vpop.f32.mrf.mxu0
      %v2006 = vadd.f32 %v1688, %v2005
      %v2007 = vpop.f32.mrf.mxu0
      %2008 = vmatprep.mubr.f32.mxu0 0.0
      %2009 = vmatmul.mubr.f32.gmra.mxu0 %v1775
      %v2010 = vpop.f32.mrf.mxu0
      %v2011 = vadd.f32 %v1688, %v2010
      %v2012 = vpop.f32.mrf.mxu0
      %2013 = vmatprep.mubr.f32.mxu0 0.0
      %2014 = vmatmul.mubr.f32.gmra.mxu0 %v1778
      %v2015 = vpop.f32.mrf.mxu0
      %v2016 = vadd.f32 %v1688, %v2015
      %v2017 = vpop.f32.mrf.mxu0
      %2018 = vmatprep.mubr.f32.mxu0 0.0
      %2019 = vmatmul.mubr.f32.gmra.mxu0 %v1781
      %v2020 = vpop.f32.mrf.mxu0
      %v2021 = vadd.f32 %v1688, %v2020
      %v2022 = vpop.f32.mrf.mxu0
      %2023 = vmatprep.mubr.f32.mxu0 0.0
      %2024 = vmatmul.mubr.f32.gmra.mxu0 %v1784
      %v2025 = vpop.f32.mrf.mxu0
      %v2026 = vadd.f32 %v1688, %v2025
      %v2027 = vpop.f32.mrf.mxu0
      %2028 = vmatprep.mubr.f32.mxu0 0.0
      %2029 = vmatmul.mubr.f32.gmra.mxu0 %v1787
      %v2030 = vpop.f32.mrf.mxu0
      %v2031 = vadd.f32 %v1688, %v2030
      %v2032 = vpop.f32.mrf.mxu0
      %2033 = vmatprep.mubr.f32.mxu0 0.0
      %2034 = vmatmul.mubr.f32.gmra.mxu0 %v1790
      %v2035 = vpop.f32.mrf.mxu0
      %v2036 = vadd.f32 %v1688, %v2035
      %v2037 = vpop.f32.mrf.mxu0
      %2038 = vmatprep.mubr.f32.mxu0 0.0
      %2039 = vmatmul.mubr.f32.gmra.mxu0 %v1793
      %v2040 = vpop.f32.mrf.mxu0
      %v2041 = vadd.f32 %v1688, %v2040
      %v2042 = vpop.f32.mrf.mxu0
      %2043 = vmatprep.mubr.f32.mxu0 0.0
      %2044 = vmatmul.mubr.f32.gmra.mxu0 %v1796
      %v2045 = vpop.f32.mrf.mxu0
      %v2046 = vadd.f32 %v1688, %v2045
      %v2047 = vpop.f32.mrf.mxu0
      %2048 = vmatprep.mubr.f32.mxu0 0.0
      %2049 = vmatmul.mubr.f32.gmra.mxu0 %v1799
      %v2050 = vpop.f32.mrf.mxu0
      %v2051 = vadd.f32 %v1688, %v2050
      %v2052 = vpop.f32.mrf.mxu0
      %2053 = vmatprep.mubr.f32.mxu0 0.0
      %2054 = vmatmul.mubr.f32.gmra.mxu0 %v1802
      %v2055 = vpop.f32.mrf.mxu0
      %v2056 = vadd.f32 %v1688, %v2055
      %v2057 = vpop.f32.mrf.mxu0
      %2058 = vdwg.mxu0
      %vm2059 = vcmask 64512
      %2060 = vst.msk [vmem:[%s172] sm:$0xff] %vm2059, %v1871
      %2061 = vst.msk [vmem:[%s172 + $0x8] sm:$0xff] %vm2059, %v1876
      %2062 = vst.msk [vmem:[%s172 + $0x10] sm:$0xff] %vm2059, %v1881
      %2063 = vst.msk [vmem:[%s172 + $0x18] sm:$0xff] %vm2059, %v1886
      %2064 = vst.msk [vmem:[%s172 + $0x20] sm:$0xff] %vm2059, %v1891
      %2065 = vst.msk [vmem:[%s172 + $0x28] sm:$0xff] %vm2059, %v1896
      %2066 = vst.msk [vmem:[%s172 + $0x30] sm:$0xff] %vm2059, %v1901
      %2067 = vst.msk [vmem:[%s172 + $0x38] sm:$0xff] %vm2059, %v1906
      %2068 = vst.msk [vmem:[%s172 + $0x40] sm:$0xff] %vm2059, %v1911
      %2069 = vst.msk [vmem:[%s172 + $0x48] sm:$0xff] %vm2059, %v1916
      %2070 = vst.msk [vmem:[%s172 + $0x50] sm:$0xff] %vm2059, %v1921
      %2071 = vst.msk [vmem:[%s172 + $0x58] sm:$0xff] %vm2059, %v1926
      %2072 = vst.msk [vmem:[%s172 + $0x60] sm:$0xff] %vm2059, %v1931
      %2073 = vst.msk [vmem:[%s172 + $0x68] sm:$0xff] %vm2059, %v1936
      %2074 = vst.msk [vmem:[%s172 + $0x70] sm:$0xff] %vm2059, %v1941
      %2075 = vst.msk [vmem:[%s172 + $0x78] sm:$0xff] %vm2059, %v1946
      %2076 = vst.msk [vmem:[%s172 + $0x80] sm:$0xff] %vm2059, %v1951
      %2077 = vst.msk [vmem:[%s172 + $0x88] sm:$0xff] %vm2059, %v1956
      %2078 = vst.msk [vmem:[%s172 + $0x90] sm:$0xff] %vm2059, %v1961
      %2079 = vst.msk [vmem:[%s172 + $0x98] sm:$0xff] %vm2059, %v1966
      %2080 = vst.msk [vmem:[%s172 + $0xa0] sm:$0xff] %vm2059, %v1971
      %2081 = vst.msk [vmem:[%s172 + $0xa8] sm:$0xff] %vm2059, %v1976
      %2082 = vst.msk [vmem:[%s172 + $0xb0] sm:$0xff] %vm2059, %v1981
      %2083 = vst.msk [vmem:[%s172 + $0xb8] sm:$0xff] %vm2059, %v1986
      %2084 = vst.msk [vmem:[%s172 + $0xc0] sm:$0xff] %vm2059, %v1991
      %2085 = vst.msk [vmem:[%s172 + $0xc8] sm:$0xff] %vm2059, %v1996
      %2086 = vst.msk [vmem:[%s172 + $0xd0] sm:$0xff] %vm2059, %v2001
      %2087 = vst.msk [vmem:[%s172 + $0xd8] sm:$0xff] %vm2059, %v2006
      %2088 = vst.msk [vmem:[%s172 + $0xe0] sm:$0xff] %vm2059, %v2011
      %2089 = vst.msk [vmem:[%s172 + $0xe8] sm:$0xff] %vm2059, %v2016
      %2090 = vst.msk [vmem:[%s172 + $0xf0] sm:$0xff] %vm2059, %v2021
      %2091 = vst.msk [vmem:[%s172 + $0xf8] sm:$0xff] %vm2059, %v2026
      %2092 = vst.msk [vmem:[%s172 + $0x100] sm:$0xff] %vm2059, %v2031
      %2093 = vst.msk [vmem:[%s172 + $0x108] sm:$0xff] %vm2059, %v2036
      %2094 = vst.msk [vmem:[%s172 + $0x110] sm:$0xff] %vm2059, %v2041
      %2095 = vst.msk [vmem:[%s172 + $0x118] sm:$0xff] %vm2059, %v2046
      %2096 = vst.msk [vmem:[%s172 + $0x120] sm:$0xff] %vm2059, %v2051
      %2097 = vst.msk [vmem:[%s172 + $0x128] sm:$0xff] %vm2059, %v2056
      %s2098 = smul.u32 38, %s14
      %p2099 = scmp.lt.s32.totalorder %s2098, 75
      %s2100 = scalar_select %p2099, %s2098, 75
      %s2101 = smul.addr %s2100, 8
      %s2102 = scalar_lea.vmem %s3, %s2101
      // Predicated region
      $region33: #{tpu_custom_call.1} parent=31 // pred_check
        %p2103 = pneg %p100
      $region34: #{tpu_custom_call.1} parent=31 // pred_check_branch
        %2105 = sbr.rel (%p2103) target = $region36
      $region35: #{tpu_custom_call.1} parent=31 // pred_region
        %s2106 = smul.u32 38, %s14
      $region36: #{tpu_custom_call.1} parent=31 // pred_fallthru
        _
    $region32: #{tpu_custom_call.1} parent=5 // pred_fallthru
      _
    %p2107 = scmp.le.s32.totalorder 2, %s9
    // Predicated region
    $region37: #{tpu_custom_call.1} parent=5 // pred_check
      %p2108 = pneg %p2107
    $region38: #{tpu_custom_call.1} parent=5 // pred_check_branch
      %2110 = sbr.rel (%p2108) target = $region40
    $region39: #{tpu_custom_call.1} parent=5 // pred_region
      %s2111 = ssub.s32 %s9, 2
      // Predicated region
      $region41: #{tpu_custom_call.1} parent=39 // pred_check
        %p2112 = pneg %p106
      $region42: #{tpu_custom_call.1} parent=39 // pred_check_branch
        %2114 = sbr.rel (%p2112) target = $region44
      $region43: #{tpu_custom_call.1} parent=39 // pred_region
        %s2115 = smul.u32 38, %s15
        %p2116 = scmp.lt.s32.totalorder %s2115, 75
        %s2117 = scalar_select %p2116, %s2115, 75
        %s2118 = smul.addr %s2117, 8
        %s2119 = scalar_lea.vmem %s3, %s2118
      $region44: #{tpu_custom_call.1} parent=39 // pred_fallthru
        _
    $region40: #{tpu_custom_call.1} parent=5 // pred_fallthru
      _
  $region6: #{tpu_custom_call.1} parent=0 // loop_footer
    %s13 = sadd.s32 1, %s9
  $region7: #{tpu_custom_call.1} parent=0 // loop_footer_branch
    %8 = sbr.rel target = $region3
  $region8: #{tpu_custom_call.1} parent=0 // loop_exit
    _

</llo_original>
